<compile_context>
chip_gen: v7x
topology: tpu7x:2x2x1
jax: 0.10.0
libtpu: 0.0.40
codegen_flags: <defaults>
</compile_context>

<pallas_src>
import functools
import math

import numpy as np

import jax
import jax.numpy as jnp
from jax import lax
from jax.experimental import pallas as pl
from jax.experimental.pallas import tpu as pltpu

EPS = 1e-5  # nn.BatchNorm2d default eps


# ---------------------------------------------------------------------------
# The single fused kernel
# ---------------------------------------------------------------------------
def _fused_conv_bn_relu_kernel(x_ref, s_ref, b_ref, bias_ref, gamma_ref,
                               beta_ref, r_ref, o_ref, *, n_layers, inv_count):
    """Whole network forward on the whole (folded) batch, resident in VMEM.

    x_ref:     (NH, WC)        folded input activations, f32
    s_ref:     (2, NH, NH)     vertical shift matrices (up / down), bf16
    b_ref:     (L, 3, WC, WC)  folded banded conv weights per layer per dy, bf16
    bias_ref:  (L, 1, WC)      conv bias tiled over W, f32
    gamma_ref: (L, 1, WC)      BN weight tiled over W, f32
    beta_ref:  (L, 1, WC)      BN bias tiled over W, f32
    r_ref:     (WC, WC)        per-channel "sum over W, broadcast over W" 0/1, f32
    o_ref:     (NH, WC)        final output, f32
    """
    x = x_ref[...]                                   # (NH, WC) f32
    s_up = s_ref[0]                                  # (NH, NH) bf16
    s_dn = s_ref[1]
    r_mat = r_ref[...]                               # (WC, WC) f32

    for l in range(n_layers):
        xb = x.astype(jnp.bfloat16)

        # Vertical +/-1 row shifts (image-boundary zeros + cross-image
        # separation baked into the banded permutation matrices).
        ub = jnp.dot(s_up, xb, preferred_element_type=jnp.float32).astype(jnp.bfloat16)
        db = jnp.dot(s_dn, xb, preferred_element_type=jnp.float32).astype(jnp.bfloat16)

        # 3x3 conv = 3 lane-dense MXU matmuls; dx taps and width zero padding
        # are already baked into the folded banded weights.  Single f32
        # accumulator chain (in-place accumulate on v7x's MRB).
        acc = jnp.dot(ub, b_ref[l, 0], preferred_element_type=jnp.float32)
        acc = acc + jnp.dot(xb, b_ref[l, 1], preferred_element_type=jnp.float32)
        acc = acc + jnp.dot(db, b_ref[l, 2], preferred_element_type=jnp.float32)
        acc = acc + bias_ref[l]                      # (1, WC) broadcast

        # Exact training-mode BatchNorm2d over (N, H, W) per channel.
        # Two-pass (centered) variance to avoid E[x^2]-E[x]^2 cancellation.
        s1 = jnp.sum(acc, axis=0, keepdims=True)                         # (1, WC)
        mean = jnp.dot(s1, r_mat, preferred_element_type=jnp.float32) * inv_count
        cen = acc - mean
        s2 = jnp.sum(cen * cen, axis=0, keepdims=True)                   # (1, WC)
        var = jnp.dot(s2, r_mat, preferred_element_type=jnp.float32) * inv_count
        scale = gamma_ref[l] * lax.rsqrt(var + EPS)

        # BN affine + ReLU, fused (this becomes the next layer's input).
        x = jnp.maximum(cen * scale + beta_ref[l], 0.0)

    o_ref[...] = x


# ---------------------------------------------------------------------------
# pallas_call wrapper (one launch for the whole network)
# ---------------------------------------------------------------------------
def _fused_forward(x_f, s_mat, b_all, bias_all, gamma_all, beta_all, r_mat,
                   *, width):
    nh, wc = x_f.shape
    n_layers = b_all.shape[0]
    inv_count = 1.0 / float(nh * width)
    kernel = functools.partial(_fused_conv_bn_relu_kernel,
                               n_layers=n_layers, inv_count=inv_count)
    return pl.pallas_call(
        kernel,
        grid=(1,),
        out_shape=jax.ShapeDtypeStruct((nh, wc), jnp.float32),
        in_specs=[
            pl.BlockSpec((nh, wc), lambda i: (0, 0)),
            pl.BlockSpec(s_mat.shape, lambda i: (0, 0, 0)),
            pl.BlockSpec(b_all.shape, lambda i: (0, 0, 0, 0)),
            pl.BlockSpec(bias_all.shape, lambda i: (0, 0, 0)),
            pl.BlockSpec(gamma_all.shape, lambda i: (0, 0, 0)),
            pl.BlockSpec(beta_all.shape, lambda i: (0, 0, 0)),
            pl.BlockSpec((wc, wc), lambda i: (0, 0)),
        ],
        out_specs=pl.BlockSpec((nh, wc), lambda i: (0, 0)),
        compiler_params=pltpu.CompilerParams(
            dimension_semantics=("arbitrary",),
            vmem_limit_bytes=32 * 1024 * 1024,   # ample; also safe on v7x (64 MiB)
        ),
    )(x_f, s_mat, b_all, bias_all, gamma_all, beta_all, r_mat)


# ---------------------------------------------------------------------------
# Host-side parameter / constant folding (computed once, cached)
# ---------------------------------------------------------------------------
def _fold_conv_weight(w_hwio, width):
    """HWIO (3,3,Cin,Cout) -> (3, W*Cin, W*Cout) block-banded matrices.

    B[dy][w_in*Cin + ci, w_out*Cout + co] = w[dy, w_in - w_out + 1, ci, co]
    (zero outside the 3-wide band), encoding the dx taps and the width-edge
    zero padding of a padding=1 conv."""
    kh, kw, cin, cout = w_hwio.shape
    wi = jnp.arange(width)[:, None]
    wo = jnp.arange(width)[None, :]
    dx = wi - wo + 1                                        # (W, W)
    valid = (dx >= 0) & (dx < kw)
    g = w_hwio[:, jnp.clip(dx, 0, kw - 1)]                  # (3, W, W, Cin, Cout)
    g = jnp.where(valid[None, :, :, None, None], g, 0.0)
    return jnp.transpose(g, (0, 1, 3, 2, 4)).reshape(kh, width * cin, width * cout)


def _shift_matrices(n, h):
    """(2, N*H, N*H) bf16 banded permutations: up-neighbor / down-neighbor with
    zero rows at each image's top/bottom (no cross-image mixing)."""
    nh = n * h
    i = np.arange(nh)[:, None]
    j = np.arange(nh)[None, :]
    same_img = (i // h) == (j // h)
    s_up = ((j == i - 1) & same_img).astype(np.float32)     # ub[r] = x[r-1]
    s_dn = ((j == i + 1) & same_img).astype(np.float32)     # db[r] = x[r+1]
    return jnp.asarray(np.stack([s_up, s_dn]), dtype=jnp.bfloat16)


def _channel_reduce_matrix(width, c):
    """(WC, WC) f32 0/1 matrix: sum lanes sharing a channel, broadcast back."""
    wc = width * c
    i = np.arange(wc)[:, None]
    j = np.arange(wc)[None, :]
    return jnp.asarray((i % c) == (j % c), dtype=np.float32)


@jax.jit
def conv_forward(folded, x_nchw):
    """3 x [Conv2d(C,C,3,1,1) -> BatchNorm2d(C) -> ReLU]; NCHW in / NCHW out."""
    b_all, bias_all, gamma_all, beta_all = folded
    n, c, h, w = x_nchw.shape
    wc = w * c                     # folded lane dim; == 128 in the demo (best case)
    x_f = jnp.transpose(x_nchw, (0, 2, 3, 1)).reshape(n * h, wc)
    s_mat = _shift_matrices(n, h)              # trace-time constants
    r_mat = _channel_reduce_matrix(w, c)
    y = _fused_forward(x_f, s_mat, b_all, bias_all, gamma_all, beta_all, r_mat,
                       width=w)
    return jnp.transpose(y.reshape(n, h, w, c), (0, 3, 1, 2))


class Conv:
    """JAX/Pallas port of the PyTorch `Conv` module (forward pass).

    Conv weights are stored HWIO (kh, kw, Cin, Cout), equivalent to PyTorch's
    OIHW up to a transpose (weights are synthetic here anyway)."""

    def __init__(self, in_dim, key):
        self.in_dim = in_dim
        self.params = []
        bound = 1.0 / math.sqrt(in_dim * 3 * 3)  # PyTorch Conv2d default init
        for _ in range(3):
            key, k_w, k_b = jax.random.split(key, 3)
            w = jax.random.uniform(k_w, (3, 3, in_dim, in_dim),
                                   jnp.float32, -bound, bound)
            b = jax.random.uniform(k_b, (in_dim,), jnp.float32, -bound, bound)
            gamma = jnp.ones((in_dim,), jnp.float32)   # BN weight init
            beta = jnp.zeros((in_dim,), jnp.float32)   # BN bias init
            self.params.append((w, b, gamma, beta))
        self._folded_cache = {}

    def _folded(self, width):
        if width not in self._folded_cache:
            wc = width * self.in_dim
            b_all = jnp.stack([_fold_conv_weight(w, width)
                               for (w, _, _, _) in self.params]).astype(jnp.bfloat16)
            bias_all = jnp.stack([jnp.tile(b, width).reshape(1, wc)
                                  for (_, b, _, _) in self.params])
            gamma_all = jnp.stack([jnp.tile(g, width).reshape(1, wc)
                                   for (_, _, g, _) in self.params])
            beta_all = jnp.stack([jnp.tile(bt, width).reshape(1, wc)
                                  for (_, _, _, bt) in self.params])
            self._folded_cache[width] = (b_all, bias_all, gamma_all, beta_all)
        return self._folded_cache[width]

    def __call__(self, x_nchw):
        return conv_forward(self._folded(x_nchw.shape[3]), x_nchw)


# ---------------------------------------------------------------------------
# Pure-JAX reference (loose numerical check; kernel uses bf16 MXU operands)
# ---------------------------------------------------------------------------
@jax.jit
def _reference_forward(params, x_nchw):
    x = x_nchw
    for (w, b, gamma, beta) in params:
        y = lax.conv_general_dilated(
            x, w, window_strides=(1, 1), padding=((1, 1), (1, 1)),
            dimension_numbers=("NCHW", "HWIO", "NCHW"))
        y = y + b[None, :, None, None]
        mu = jnp.mean(y, axis=(0, 2, 3), keepdims=True)
        var = jnp.mean((y - mu) ** 2, axis=(0, 2, 3), keepdims=True)
        y = (y - mu) * lax.rsqrt(var + EPS)
        y = y * gamma[None, :, None, None] + beta[None, :, None, None]
        x = jnp.maximum(y, 0.0)
    return x


if __name__ == "__main__":
    key = jax.random.PRNGKey(0)
    k_x, k_p = jax.random.split(key)

    N, C, H, W = 2, 8, 16, 16          # W*C = 128 -> fully lane-dense folding
    x = jax.random.normal(k_x, (N, C, H, W), jnp.float32)

    model = Conv(in_dim=C, key=k_p)
    out = jax.block_until_ready(model(x))

    assert out.shape == (N, C, H, W), out.shape
    assert out.dtype == jnp.float32

    ref = jax.block_until_ready(_reference_forward(model.params, x))
    max_err = float(jnp.max(jnp.abs(out - ref)))
    assert max_err < 0.2, f"max |err| vs reference = {max_err}"

    print("KERNEL_OK")
</pallas_src>

<mosaic_0001>
module attributes {stable_mosaic.version = 11 : i64} {
  func.func @_fused_conv_bn_relu_kernel(%arg0: i32, %arg1: memref<32x128xf32, #tpu.memory_space<vmem>>, %arg2: memref<2x32x32xbf16, #tpu.memory_space<vmem>>, %arg3: memref<3x3x128x128xbf16, #tpu.memory_space<vmem>>, %arg4: memref<3x1x128xf32, #tpu.memory_space<vmem>>, %arg5: memref<3x1x128xf32, #tpu.memory_space<vmem>>, %arg6: memref<3x1x128xf32, #tpu.memory_space<vmem>>, %arg7: memref<128x128xf32, #tpu.memory_space<vmem>>, %arg8: memref<32x128xf32, #tpu.memory_space<vmem>>) attributes {dimension_semantics = [#tpu.dimension_semantics<arbitrary>], iteration_bounds = array<i64: 1>, scalar_prefetch = 0 : i64, scratch_operands = 0 : i64, tpu.core_type = #tpu.core_type<tc>, window_params = [{pipeline_mode = #tpu.pipeline_mode<synchronous>, transform_indices = @transform_0, window_bounds = array<i64: 32, 128>}, {pipeline_mode = #tpu.pipeline_mode<synchronous>, transform_indices = @transform_1, window_bounds = array<i64: 2, 32, 32>}, {pipeline_mode = #tpu.pipeline_mode<synchronous>, transform_indices = @transform_2, window_bounds = array<i64: 3, 3, 128, 128>}, {pipeline_mode = #tpu.pipeline_mode<synchronous>, transform_indices = @transform_3, window_bounds = array<i64: 3, 1, 128>}, {pipeline_mode = #tpu.pipeline_mode<synchronous>, transform_indices = @transform_4, window_bounds = array<i64: 3, 1, 128>}, {pipeline_mode = #tpu.pipeline_mode<synchronous>, transform_indices = @transform_5, window_bounds = array<i64: 3, 1, 128>}, {pipeline_mode = #tpu.pipeline_mode<synchronous>, transform_indices = @transform_6, window_bounds = array<i64: 128, 128>}, {pipeline_mode = #tpu.pipeline_mode<synchronous>, transform_indices = @transform_7, window_bounds = array<i64: 32, 128>}]} {
    %c0 = arith.constant 0 : index
    %c0_0 = arith.constant 0 : index
    %0 = vector.load %arg1[%c0, %c0_0] : memref<32x128xf32, #tpu.memory_space<vmem>>, vector<32x128xf32>
    %c0_1 = arith.constant 0 : index
    %c0_2 = arith.constant 0 : index
    %c0_3 = arith.constant 0 : index
    %1 = vector.load %arg2[%c0_1, %c0_2, %c0_3] : memref<2x32x32xbf16, #tpu.memory_space<vmem>>, vector<1x32x32xbf16>
    %2 = vector.shape_cast %1 : vector<1x32x32xbf16> to vector<32x32xbf16>
    %c1 = arith.constant 1 : index
    %c0_4 = arith.constant 0 : index
    %c0_5 = arith.constant 0 : index
    %3 = vector.load %arg2[%c1, %c0_4, %c0_5] : memref<2x32x32xbf16, #tpu.memory_space<vmem>>, vector<1x32x32xbf16>
    %4 = vector.shape_cast %3 : vector<1x32x32xbf16> to vector<32x32xbf16>
    %c0_6 = arith.constant 0 : index
    %c0_7 = arith.constant 0 : index
    %5 = vector.load %arg7[%c0_6, %c0_7] : memref<128x128xf32, #tpu.memory_space<vmem>>, vector<128x128xf32>
    %6 = arith.truncf %0 : vector<32x128xf32> to vector<32x128xbf16>
    %cst = arith.constant dense<0.000000e+00> : vector<32x128xf32>
    %7 = tpu.matmul %2, %6, %cst {dimension_numbers = #tpu.dot_dimension_numbers<[1], [0], [0], [1], [0, 0, 1, 1], [], []>} : vector<32x32xbf16>, vector<32x128xbf16>, vector<32x128xf32> -> vector<32x128xf32>
    %8 = arith.truncf %7 : vector<32x128xf32> to vector<32x128xbf16>
    %cst_8 = arith.constant dense<0.000000e+00> : vector<32x128xf32>
    %9 = tpu.matmul %4, %6, %cst_8 {dimension_numbers = #tpu.dot_dimension_numbers<[1], [0], [0], [1], [0, 0, 1, 1], [], []>} : vector<32x32xbf16>, vector<32x128xbf16>, vector<32x128xf32> -> vector<32x128xf32>
    %10 = arith.truncf %9 : vector<32x128xf32> to vector<32x128xbf16>
    %c0_9 = arith.constant 0 : index
    %c0_10 = arith.constant 0 : index
    %c0_11 = arith.constant 0 : index
    %c0_12 = arith.constant 0 : index
    %11 = vector.load %arg3[%c0_9, %c0_10, %c0_11, %c0_12] : memref<3x3x128x128xbf16, #tpu.memory_space<vmem>>, vector<1x1x128x128xbf16>
    %12 = vector.shape_cast %11 : vector<1x1x128x128xbf16> to vector<128x128xbf16>
    %cst_13 = arith.constant dense<0.000000e+00> : vector<32x128xf32>
    %13 = tpu.matmul %8, %12, %cst_13 {dimension_numbers = #tpu.dot_dimension_numbers<[1], [0], [0], [1], [0, 0, 1, 1], [], []>} : vector<32x128xbf16>, vector<128x128xbf16>, vector<32x128xf32> -> vector<32x128xf32>
    %c0_14 = arith.constant 0 : index
    %c1_15 = arith.constant 1 : index
    %c0_16 = arith.constant 0 : index
    %c0_17 = arith.constant 0 : index
    %14 = vector.load %arg3[%c0_14, %c1_15, %c0_16, %c0_17] : memref<3x3x128x128xbf16, #tpu.memory_space<vmem>>, vector<1x1x128x128xbf16>
    %15 = vector.shape_cast %14 : vector<1x1x128x128xbf16> to vector<128x128xbf16>
    %cst_18 = arith.constant dense<0.000000e+00> : vector<32x128xf32>
    %16 = tpu.matmul %6, %15, %cst_18 {dimension_numbers = #tpu.dot_dimension_numbers<[1], [0], [0], [1], [0, 0, 1, 1], [], []>} : vector<32x128xbf16>, vector<128x128xbf16>, vector<32x128xf32> -> vector<32x128xf32>
    %17 = arith.addf %13, %16 : vector<32x128xf32>
    %c0_19 = arith.constant 0 : index
    %c2 = arith.constant 2 : index
    %c0_20 = arith.constant 0 : index
    %c0_21 = arith.constant 0 : index
    %18 = vector.load %arg3[%c0_19, %c2, %c0_20, %c0_21] : memref<3x3x128x128xbf16, #tpu.memory_space<vmem>>, vector<1x1x128x128xbf16>
    %19 = vector.shape_cast %18 : vector<1x1x128x128xbf16> to vector<128x128xbf16>
    %cst_22 = arith.constant dense<0.000000e+00> : vector<32x128xf32>
    %20 = tpu.matmul %10, %19, %cst_22 {dimension_numbers = #tpu.dot_dimension_numbers<[1], [0], [0], [1], [0, 0, 1, 1], [], []>} : vector<32x128xbf16>, vector<128x128xbf16>, vector<32x128xf32> -> vector<32x128xf32>
    %21 = arith.addf %17, %20 : vector<32x128xf32>
    %c0_23 = arith.constant 0 : index
    %c0_24 = arith.constant 0 : index
    %c0_25 = arith.constant 0 : index
    %22 = vector.load %arg4[%c0_23, %c0_24, %c0_25] : memref<3x1x128xf32, #tpu.memory_space<vmem>>, vector<1x1x128xf32>
    %23 = vector.shape_cast %22 : vector<1x1x128xf32> to vector<1x128xf32>
    %24 = vector.broadcast %23 : vector<1x128xf32> to vector<32x128xf32>
    %25 = arith.addf %21, %24 : vector<32x128xf32>
    %cst_26 = arith.constant dense<0.000000e+00> : vector<128xf32>
    %26 = vector.multi_reduction <add>, %25, %cst_26 [0] : vector<32x128xf32> to vector<128xf32>
    %27 = vector.shape_cast %26 : vector<128xf32> to vector<1x128xf32>
    %cst_27 = arith.constant dense<0.000000e+00> : vector<1x128xf32>
    %28 = tpu.matmul %27, %5, %cst_27 {dimension_numbers = #tpu.dot_dimension_numbers<[1], [0], [0], [1], [0, 0, 1, 1], [], []>} : vector<1x128xf32>, vector<128x128xf32>, vector<1x128xf32> -> vector<1x128xf32>
    %cst_28 = arith.constant 0.001953125 : f32
    %29 = vector.broadcast %cst_28 : f32 to vector<1x128xf32>
    %30 = arith.mulf %28, %29 : vector<1x128xf32>
    %31 = vector.broadcast %30 : vector<1x128xf32> to vector<32x128xf32>
    %32 = arith.subf %25, %31 : vector<32x128xf32>
    %33 = arith.mulf %32, %32 : vector<32x128xf32>
    %cst_29 = arith.constant dense<0.000000e+00> : vector<128xf32>
    %34 = vector.multi_reduction <add>, %33, %cst_29 [0] : vector<32x128xf32> to vector<128xf32>
    %35 = vector.shape_cast %34 : vector<128xf32> to vector<1x128xf32>
    %cst_30 = arith.constant dense<0.000000e+00> : vector<1x128xf32>
    %36 = tpu.matmul %35, %5, %cst_30 {dimension_numbers = #tpu.dot_dimension_numbers<[1], [0], [0], [1], [0, 0, 1, 1], [], []>} : vector<1x128xf32>, vector<128x128xf32>, vector<1x128xf32> -> vector<1x128xf32>
    %cst_31 = arith.constant 0.001953125 : f32
    %37 = vector.broadcast %cst_31 : f32 to vector<1x128xf32>
    %38 = arith.mulf %36, %37 : vector<1x128xf32>
    %c0_32 = arith.constant 0 : index
    %c0_33 = arith.constant 0 : index
    %c0_34 = arith.constant 0 : index
    %39 = vector.load %arg5[%c0_32, %c0_33, %c0_34] : memref<3x1x128xf32, #tpu.memory_space<vmem>>, vector<1x1x128xf32>
    %40 = vector.shape_cast %39 : vector<1x1x128xf32> to vector<1x128xf32>
    %cst_35 = arith.constant 9.99999974E-6 : f32
    %41 = vector.broadcast %cst_35 : f32 to vector<1x128xf32>
    %42 = arith.addf %38, %41 : vector<1x128xf32>
    %43 = math.rsqrt %42 : vector<1x128xf32>
    %44 = arith.mulf %40, %43 : vector<1x128xf32>
    %45 = vector.broadcast %44 : vector<1x128xf32> to vector<32x128xf32>
    %46 = arith.mulf %32, %45 : vector<32x128xf32>
    %c0_36 = arith.constant 0 : index
    %c0_37 = arith.constant 0 : index
    %c0_38 = arith.constant 0 : index
    %47 = vector.load %arg6[%c0_36, %c0_37, %c0_38] : memref<3x1x128xf32, #tpu.memory_space<vmem>>, vector<1x1x128xf32>
    %48 = vector.shape_cast %47 : vector<1x1x128xf32> to vector<1x128xf32>
    %49 = vector.broadcast %48 : vector<1x128xf32> to vector<32x128xf32>
    %50 = arith.addf %46, %49 : vector<32x128xf32>
    %cst_39 = arith.constant 0.000000e+00 : f32
    %51 = vector.broadcast %cst_39 : f32 to vector<32x128xf32>
    %52 = arith.maximumf %50, %51 : vector<32x128xf32>
    %53 = arith.truncf %52 : vector<32x128xf32> to vector<32x128xbf16>
    %cst_40 = arith.constant dense<0.000000e+00> : vector<32x128xf32>
    %54 = tpu.matmul %2, %53, %cst_40 {dimension_numbers = #tpu.dot_dimension_numbers<[1], [0], [0], [1], [0, 0, 1, 1], [], []>} : vector<32x32xbf16>, vector<32x128xbf16>, vector<32x128xf32> -> vector<32x128xf32>
    %55 = arith.truncf %54 : vector<32x128xf32> to vector<32x128xbf16>
    %cst_41 = arith.constant dense<0.000000e+00> : vector<32x128xf32>
    %56 = tpu.matmul %4, %53, %cst_41 {dimension_numbers = #tpu.dot_dimension_numbers<[1], [0], [0], [1], [0, 0, 1, 1], [], []>} : vector<32x32xbf16>, vector<32x128xbf16>, vector<32x128xf32> -> vector<32x128xf32>
    %57 = arith.truncf %56 : vector<32x128xf32> to vector<32x128xbf16>
    %c1_42 = arith.constant 1 : index
    %c0_43 = arith.constant 0 : index
    %c0_44 = arith.constant 0 : index
    %c0_45 = arith.constant 0 : index
    %58 = vector.load %arg3[%c1_42, %c0_43, %c0_44, %c0_45] : memref<3x3x128x128xbf16, #tpu.memory_space<vmem>>, vector<1x1x128x128xbf16>
    %59 = vector.shape_cast %58 : vector<1x1x128x128xbf16> to vector<128x128xbf16>
    %cst_46 = arith.constant dense<0.000000e+00> : vector<32x128xf32>
    %60 = tpu.matmul %55, %59, %cst_46 {dimension_numbers = #tpu.dot_dimension_numbers<[1], [0], [0], [1], [0, 0, 1, 1], [], []>} : vector<32x128xbf16>, vector<128x128xbf16>, vector<32x128xf32> -> vector<32x128xf32>
    %c1_47 = arith.constant 1 : index
    %c1_48 = arith.constant 1 : index
    %c0_49 = arith.constant 0 : index
    %c0_50 = arith.constant 0 : index
    %61 = vector.load %arg3[%c1_47, %c1_48, %c0_49, %c0_50] : memref<3x3x128x128xbf16, #tpu.memory_space<vmem>>, vector<1x1x128x128xbf16>
    %62 = vector.shape_cast %61 : vector<1x1x128x128xbf16> to vector<128x128xbf16>
    %cst_51 = arith.constant dense<0.000000e+00> : vector<32x128xf32>
    %63 = tpu.matmul %53, %62, %cst_51 {dimension_numbers = #tpu.dot_dimension_numbers<[1], [0], [0], [1], [0, 0, 1, 1], [], []>} : vector<32x128xbf16>, vector<128x128xbf16>, vector<32x128xf32> -> vector<32x128xf32>
    %64 = arith.addf %60, %63 : vector<32x128xf32>
    %c1_52 = arith.constant 1 : index
    %c2_53 = arith.constant 2 : index
    %c0_54 = arith.constant 0 : index
    %c0_55 = arith.constant 0 : index
    %65 = vector.load %arg3[%c1_52, %c2_53, %c0_54, %c0_55] : memref<3x3x128x128xbf16, #tpu.memory_space<vmem>>, vector<1x1x128x128xbf16>
    %66 = vector.shape_cast %65 : vector<1x1x128x128xbf16> to vector<128x128xbf16>
    %cst_56 = arith.constant dense<0.000000e+00> : vector<32x128xf32>
    %67 = tpu.matmul %57, %66, %cst_56 {dimension_numbers = #tpu.dot_dimension_numbers<[1], [0], [0], [1], [0, 0, 1, 1], [], []>} : vector<32x128xbf16>, vector<128x128xbf16>, vector<32x128xf32> -> vector<32x128xf32>
    %68 = arith.addf %64, %67 : vector<32x128xf32>
    %c1_57 = arith.constant 1 : index
    %c0_58 = arith.constant 0 : index
    %c0_59 = arith.constant 0 : index
    %69 = vector.load %arg4[%c1_57, %c0_58, %c0_59] : memref<3x1x128xf32, #tpu.memory_space<vmem>>, vector<1x1x128xf32>
    %70 = vector.shape_cast %69 : vector<1x1x128xf32> to vector<1x128xf32>
    %71 = vector.broadcast %70 : vector<1x128xf32> to vector<32x128xf32>
    %72 = arith.addf %68, %71 : vector<32x128xf32>
    %cst_60 = arith.constant dense<0.000000e+00> : vector<128xf32>
    %73 = vector.multi_reduction <add>, %72, %cst_60 [0] : vector<32x128xf32> to vector<128xf32>
    %74 = vector.shape_cast %73 : vector<128xf32> to vector<1x128xf32>
    %cst_61 = arith.constant dense<0.000000e+00> : vector<1x128xf32>
    %75 = tpu.matmul %74, %5, %cst_61 {dimension_numbers = #tpu.dot_dimension_numbers<[1], [0], [0], [1], [0, 0, 1, 1], [], []>} : vector<1x128xf32>, vector<128x128xf32>, vector<1x128xf32> -> vector<1x128xf32>
    %cst_62 = arith.constant 0.001953125 : f32
    %76 = vector.broadcast %cst_62 : f32 to vector<1x128xf32>
    %77 = arith.mulf %75, %76 : vector<1x128xf32>
    %78 = vector.broadcast %77 : vector<1x128xf32> to vector<32x128xf32>
    %79 = arith.subf %72, %78 : vector<32x128xf32>
    %80 = arith.mulf %79, %79 : vector<32x128xf32>
    %cst_63 = arith.constant dense<0.000000e+00> : vector<128xf32>
    %81 = vector.multi_reduction <add>, %80, %cst_63 [0] : vector<32x128xf32> to vector<128xf32>
    %82 = vector.shape_cast %81 : vector<128xf32> to vector<1x128xf32>
    %cst_64 = arith.constant dense<0.000000e+00> : vector<1x128xf32>
    %83 = tpu.matmul %82, %5, %cst_64 {dimension_numbers = #tpu.dot_dimension_numbers<[1], [0], [0], [1], [0, 0, 1, 1], [], []>} : vector<1x128xf32>, vector<128x128xf32>, vector<1x128xf32> -> vector<1x128xf32>
    %cst_65 = arith.constant 0.001953125 : f32
    %84 = vector.broadcast %cst_65 : f32 to vector<1x128xf32>
    %85 = arith.mulf %83, %84 : vector<1x128xf32>
    %c1_66 = arith.constant 1 : index
    %c0_67 = arith.constant 0 : index
    %c0_68 = arith.constant 0 : index
    %86 = vector.load %arg5[%c1_66, %c0_67, %c0_68] : memref<3x1x128xf32, #tpu.memory_space<vmem>>, vector<1x1x128xf32>
    %87 = vector.shape_cast %86 : vector<1x1x128xf32> to vector<1x128xf32>
    %cst_69 = arith.constant 9.99999974E-6 : f32
    %88 = vector.broadcast %cst_69 : f32 to vector<1x128xf32>
    %89 = arith.addf %85, %88 : vector<1x128xf32>
    %90 = math.rsqrt %89 : vector<1x128xf32>
    %91 = arith.mulf %87, %90 : vector<1x128xf32>
    %92 = vector.broadcast %91 : vector<1x128xf32> to vector<32x128xf32>
    %93 = arith.mulf %79, %92 : vector<32x128xf32>
    %c1_70 = arith.constant 1 : index
    %c0_71 = arith.constant 0 : index
    %c0_72 = arith.constant 0 : index
    %94 = vector.load %arg6[%c1_70, %c0_71, %c0_72] : memref<3x1x128xf32, #tpu.memory_space<vmem>>, vector<1x1x128xf32>
    %95 = vector.shape_cast %94 : vector<1x1x128xf32> to vector<1x128xf32>
    %96 = vector.broadcast %95 : vector<1x128xf32> to vector<32x128xf32>
    %97 = arith.addf %93, %96 : vector<32x128xf32>
    %cst_73 = arith.constant 0.000000e+00 : f32
    %98 = vector.broadcast %cst_73 : f32 to vector<32x128xf32>
    %99 = arith.maximumf %97, %98 : vector<32x128xf32>
    %100 = arith.truncf %99 : vector<32x128xf32> to vector<32x128xbf16>
    %cst_74 = arith.constant dense<0.000000e+00> : vector<32x128xf32>
    %101 = tpu.matmul %2, %100, %cst_74 {dimension_numbers = #tpu.dot_dimension_numbers<[1], [0], [0], [1], [0, 0, 1, 1], [], []>} : vector<32x32xbf16>, vector<32x128xbf16>, vector<32x128xf32> -> vector<32x128xf32>
    %102 = arith.truncf %101 : vector<32x128xf32> to vector<32x128xbf16>
    %cst_75 = arith.constant dense<0.000000e+00> : vector<32x128xf32>
    %103 = tpu.matmul %4, %100, %cst_75 {dimension_numbers = #tpu.dot_dimension_numbers<[1], [0], [0], [1], [0, 0, 1, 1], [], []>} : vector<32x32xbf16>, vector<32x128xbf16>, vector<32x128xf32> -> vector<32x128xf32>
    %104 = arith.truncf %103 : vector<32x128xf32> to vector<32x128xbf16>
    %c2_76 = arith.constant 2 : index
    %c0_77 = arith.constant 0 : index
    %c0_78 = arith.constant 0 : index
    %c0_79 = arith.constant 0 : index
    %105 = vector.load %arg3[%c2_76, %c0_77, %c0_78, %c0_79] : memref<3x3x128x128xbf16, #tpu.memory_space<vmem>>, vector<1x1x128x128xbf16>
    %106 = vector.shape_cast %105 : vector<1x1x128x128xbf16> to vector<128x128xbf16>
    %cst_80 = arith.constant dense<0.000000e+00> : vector<32x128xf32>
    %107 = tpu.matmul %102, %106, %cst_80 {dimension_numbers = #tpu.dot_dimension_numbers<[1], [0], [0], [1], [0, 0, 1, 1], [], []>} : vector<32x128xbf16>, vector<128x128xbf16>, vector<32x128xf32> -> vector<32x128xf32>
    %c2_81 = arith.constant 2 : index
    %c1_82 = arith.constant 1 : index
    %c0_83 = arith.constant 0 : index
    %c0_84 = arith.constant 0 : index
    %108 = vector.load %arg3[%c2_81, %c1_82, %c0_83, %c0_84] : memref<3x3x128x128xbf16, #tpu.memory_space<vmem>>, vector<1x1x128x128xbf16>
    %109 = vector.shape_cast %108 : vector<1x1x128x128xbf16> to vector<128x128xbf16>
    %cst_85 = arith.constant dense<0.000000e+00> : vector<32x128xf32>
    %110 = tpu.matmul %100, %109, %cst_85 {dimension_numbers = #tpu.dot_dimension_numbers<[1], [0], [0], [1], [0, 0, 1, 1], [], []>} : vector<32x128xbf16>, vector<128x128xbf16>, vector<32x128xf32> -> vector<32x128xf32>
    %111 = arith.addf %107, %110 : vector<32x128xf32>
    %c2_86 = arith.constant 2 : index
    %c2_87 = arith.constant 2 : index
    %c0_88 = arith.constant 0 : index
    %c0_89 = arith.constant 0 : index
    %112 = vector.load %arg3[%c2_86, %c2_87, %c0_88, %c0_89] : memref<3x3x128x128xbf16, #tpu.memory_space<vmem>>, vector<1x1x128x128xbf16>
    %113 = vector.shape_cast %112 : vector<1x1x128x128xbf16> to vector<128x128xbf16>
    %cst_90 = arith.constant dense<0.000000e+00> : vector<32x128xf32>
    %114 = tpu.matmul %104, %113, %cst_90 {dimension_numbers = #tpu.dot_dimension_numbers<[1], [0], [0], [1], [0, 0, 1, 1], [], []>} : vector<32x128xbf16>, vector<128x128xbf16>, vector<32x128xf32> -> vector<32x128xf32>
    %115 = arith.addf %111, %114 : vector<32x128xf32>
    %c2_91 = arith.constant 2 : index
    %c0_92 = arith.constant 0 : index
    %c0_93 = arith.constant 0 : index
    %116 = vector.load %arg4[%c2_91, %c0_92, %c0_93] : memref<3x1x128xf32, #tpu.memory_space<vmem>>, vector<1x1x128xf32>
    %117 = vector.shape_cast %116 : vector<1x1x128xf32> to vector<1x128xf32>
    %118 = vector.broadcast %117 : vector<1x128xf32> to vector<32x128xf32>
    %119 = arith.addf %115, %118 : vector<32x128xf32>
    %cst_94 = arith.constant dense<0.000000e+00> : vector<128xf32>
    %120 = vector.multi_reduction <add>, %119, %cst_94 [0] : vector<32x128xf32> to vector<128xf32>
    %121 = vector.shape_cast %120 : vector<128xf32> to vector<1x128xf32>
    %cst_95 = arith.constant dense<0.000000e+00> : vector<1x128xf32>
    %122 = tpu.matmul %121, %5, %cst_95 {dimension_numbers = #tpu.dot_dimension_numbers<[1], [0], [0], [1], [0, 0, 1, 1], [], []>} : vector<1x128xf32>, vector<128x128xf32>, vector<1x128xf32> -> vector<1x128xf32>
    %cst_96 = arith.constant 0.001953125 : f32
    %123 = vector.broadcast %cst_96 : f32 to vector<1x128xf32>
    %124 = arith.mulf %122, %123 : vector<1x128xf32>
    %125 = vector.broadcast %124 : vector<1x128xf32> to vector<32x128xf32>
    %126 = arith.subf %119, %125 : vector<32x128xf32>
    %127 = arith.mulf %126, %126 : vector<32x128xf32>
    %cst_97 = arith.constant dense<0.000000e+00> : vector<128xf32>
    %128 = vector.multi_reduction <add>, %127, %cst_97 [0] : vector<32x128xf32> to vector<128xf32>
    %129 = vector.shape_cast %128 : vector<128xf32> to vector<1x128xf32>
    %cst_98 = arith.constant dense<0.000000e+00> : vector<1x128xf32>
    %130 = tpu.matmul %129, %5, %cst_98 {dimension_numbers = #tpu.dot_dimension_numbers<[1], [0], [0], [1], [0, 0, 1, 1], [], []>} : vector<1x128xf32>, vector<128x128xf32>, vector<1x128xf32> -> vector<1x128xf32>
    %cst_99 = arith.constant 0.001953125 : f32
    %131 = vector.broadcast %cst_99 : f32 to vector<1x128xf32>
    %132 = arith.mulf %130, %131 : vector<1x128xf32>
    %c2_100 = arith.constant 2 : index
    %c0_101 = arith.constant 0 : index
    %c0_102 = arith.constant 0 : index
    %133 = vector.load %arg5[%c2_100, %c0_101, %c0_102] : memref<3x1x128xf32, #tpu.memory_space<vmem>>, vector<1x1x128xf32>
    %134 = vector.shape_cast %133 : vector<1x1x128xf32> to vector<1x128xf32>
    %cst_103 = arith.constant 9.99999974E-6 : f32
    %135 = vector.broadcast %cst_103 : f32 to vector<1x128xf32>
    %136 = arith.addf %132, %135 : vector<1x128xf32>
    %137 = math.rsqrt %136 : vector<1x128xf32>
    %138 = arith.mulf %134, %137 : vector<1x128xf32>
    %139 = vector.broadcast %138 : vector<1x128xf32> to vector<32x128xf32>
    %140 = arith.mulf %126, %139 : vector<32x128xf32>
    %c2_104 = arith.constant 2 : index
    %c0_105 = arith.constant 0 : index
    %c0_106 = arith.constant 0 : index
    %141 = vector.load %arg6[%c2_104, %c0_105, %c0_106] : memref<3x1x128xf32, #tpu.memory_space<vmem>>, vector<1x1x128xf32>
    %142 = vector.shape_cast %141 : vector<1x1x128xf32> to vector<1x128xf32>
    %143 = vector.broadcast %142 : vector<1x128xf32> to vector<32x128xf32>
    %144 = arith.addf %140, %143 : vector<32x128xf32>
    %cst_107 = arith.constant 0.000000e+00 : f32
    %145 = vector.broadcast %cst_107 : f32 to vector<32x128xf32>
    %146 = arith.maximumf %144, %145 : vector<32x128xf32>
    %c0_108 = arith.constant 0 : index
    %c0_109 = arith.constant 0 : index
    %147 = vector.load %arg8[%c0_108, %c0_109] : memref<32x128xf32, #tpu.memory_space<vmem>>, vector<32x128xf32>
    tpu.vector_store %arg8[%c0_108, %c0_109], %146 {strides = array<i32>} : memref<32x128xf32, #tpu.memory_space<vmem>>, vector<32x128xf32>,
    return
  }
  func.func @transform_0(%arg0: i32) -> (i32, i32) {
    %c0_i32 = arith.constant 0 : i32
    %c0_i32_0 = arith.constant 0 : i32
    %c0_i32_1 = arith.constant 0 : i32
    return %c0_i32, %c0_i32_0 : i32, i32
  }
  func.func @transform_1(%arg0: i32) -> (i32, i32, i32) {
    %c0_i32 = arith.constant 0 : i32
    %c0_i32_0 = arith.constant 0 : i32
    %c0_i32_1 = arith.constant 0 : i32
    %c0_i32_2 = arith.constant 0 : i32
    return %c0_i32, %c0_i32_0, %c0_i32_1 : i32, i32, i32
  }
  func.func @transform_2(%arg0: i32) -> (i32, i32, i32, i32) {
    %c0_i32 = arith.constant 0 : i32
    %c0_i32_0 = arith.constant 0 : i32
    %c0_i32_1 = arith.constant 0 : i32
    %c0_i32_2 = arith.constant 0 : i32
    %c0_i32_3 = arith.constant 0 : i32
    return %c0_i32, %c0_i32_0, %c0_i32_1, %c0_i32_2 : i32, i32, i32, i32
  }
  func.func @transform_3(%arg0: i32) -> (i32, i32, i32) {
    %c0_i32 = arith.constant 0 : i32
    %c0_i32_0 = arith.constant 0 : i32
    %c0_i32_1 = arith.constant 0 : i32
    %c0_i32_2 = arith.constant 0 : i32
    return %c0_i32, %c0_i32_0, %c0_i32_1 : i32, i32, i32
  }
  func.func @transform_4(%arg0: i32) -> (i32, i32, i32) {
    %c0_i32 = arith.constant 0 : i32
    %c0_i32_0 = arith.constant 0 : i32
    %c0_i32_1 = arith.constant 0 : i32
    %c0_i32_2 = arith.constant 0 : i32
    return %c0_i32, %c0_i32_0, %c0_i32_1 : i32, i32, i32
  }
  func.func @transform_5(%arg0: i32) -> (i32, i32, i32) {
    %c0_i32 = arith.constant 0 : i32
    %c0_i32_0 = arith.constant 0 : i32
    %c0_i32_1 = arith.constant 0 : i32
    %c0_i32_2 = arith.constant 0 : i32
    return %c0_i32, %c0_i32_0, %c0_i32_1 : i32, i32, i32
  }
  func.func @transform_6(%arg0: i32) -> (i32, i32) {
    %c0_i32 = arith.constant 0 : i32
    %c0_i32_0 = arith.constant 0 : i32
    %c0_i32_1 = arith.constant 0 : i32
    return %c0_i32, %c0_i32_0 : i32, i32
  }
  func.func @transform_7(%arg0: i32) -> (i32, i32) {
    %c0_i32 = arith.constant 0 : i32
    %c0_i32_0 = arith.constant 0 : i32
    %c0_i32_1 = arith.constant 0 : i32
    return %c0_i32, %c0_i32_0 : i32, i32
  }
}

</mosaic_0001>

<llo_original>
// kernel: conv_forward.1
$region0: #{conv_forward.1}
  #allocation0 [shape = 'u32[]', space=smem, size = 0x4, offset = 0x4, fixed_abs, tag = 'smem constant byte address 0x4 - core index']
  #allocation1 [shape = 'u32[144,128]{1,0:T(1,128)}', space=vmem, size = 0x12000, scoped, tag = 'internal scratch']
  %s0 = inlined_call_operand.vmem [shape: f32[32,128], index: 0, kind: input, shape index: {}]
  %s1 = inlined_call_operand.vmem [shape: bf16[2,32,32], index: 1, kind: input, shape index: {}]
  %s2 = inlined_call_operand.vmem [shape: bf16[3,3,128,128], index: 2, kind: input, shape index: {}]
  %s3 = inlined_call_operand.vmem [shape: f32[3,1,128], index: 3, kind: input, shape index: {}]
  %s4 = inlined_call_operand.vmem [shape: f32[3,1,128], index: 4, kind: input, shape index: {}]
  %s5 = inlined_call_operand.vmem [shape: f32[3,1,128], index: 5, kind: input, shape index: {}]
  %s6 = inlined_call_operand.vmem [shape: f32[128,128], index: 6, kind: input, shape index: {}]
  %s7 = inlined_call_operand.vmem [shape: f32[32,128], index: 7, kind: output, shape index: {}]
  %s8 = sld [smem:[#allocation0]]
  $region38: #{conv_forward.1} parent=0
    _
  %s10 = ssub.s32 1, %s8
  %s11 = scalar_select 0, %s10, %s8
  // Predicated region
  $region2: #{conv_forward.1} parent=0 // pred_check
    _
  $region3: #{conv_forward.1} parent=0 // pred_check_branch
    %13 = sbr.rel (0) target = $region5
  $region4: #{conv_forward.1} parent=0 // pred_region
    _
  $region5: #{conv_forward.1} parent=0 // pred_fallthru
    _
  // Predicated region
  $region6: #{conv_forward.1} parent=0 // pred_check
    _
  $region7: #{conv_forward.1} parent=0 // pred_check_branch
    %15 = sbr.rel (0) target = $region9
  $region8: #{conv_forward.1} parent=0 // pred_region
    _
  $region9: #{conv_forward.1} parent=0 // pred_fallthru
    _
  // Predicated region
  $region10: #{conv_forward.1} parent=0 // pred_check
    _
  $region11: #{conv_forward.1} parent=0 // pred_check_branch
    %17 = sbr.rel (0) target = $region13
  $region12: #{conv_forward.1} parent=0 // pred_region
    _
  $region13: #{conv_forward.1} parent=0 // pred_fallthru
    _
  // Predicated region
  $region14: #{conv_forward.1} parent=0 // pred_check
    _
  $region15: #{conv_forward.1} parent=0 // pred_check_branch
    %19 = sbr.rel (0) target = $region17
  $region16: #{conv_forward.1} parent=0 // pred_region
    _
  $region17: #{conv_forward.1} parent=0 // pred_fallthru
    _
  // Predicated region
  $region18: #{conv_forward.1} parent=0 // pred_check
    _
  $region19: #{conv_forward.1} parent=0 // pred_check_branch
    %21 = sbr.rel (0) target = $region21
  $region20: #{conv_forward.1} parent=0 // pred_region
    _
  $region21: #{conv_forward.1} parent=0 // pred_fallthru
    _
  // Predicated region
  $region22: #{conv_forward.1} parent=0 // pred_check
    _
  $region23: #{conv_forward.1} parent=0 // pred_check_branch
    %23 = sbr.rel (0) target = $region25
  $region24: #{conv_forward.1} parent=0 // pred_region
    _
  $region25: #{conv_forward.1} parent=0 // pred_fallthru
    _
  // Predicated region
  $region26: #{conv_forward.1} parent=0 // pred_check
    _
  $region27: #{conv_forward.1} parent=0 // pred_check_branch
    %25 = sbr.rel (0) target = $region29
  $region28: #{conv_forward.1} parent=0 // pred_region
    _
  $region29: #{conv_forward.1} parent=0 // pred_fallthru
    _
  %v27 = vld [vmem:[%s0] sm:$0xff]
  %v28 = vld [vmem:[%s0 + $0x8] sm:$0xff]
  %v29 = vld [vmem:[%s0 + $0x10] sm:$0xff]
  %v30 = vld [vmem:[%s0 + $0x18] sm:$0xff]
  %v31 = vld [vmem:[%s1] sm:$0xf]
  %v32 = vld [vmem:[%s1 + $0x4] sm:$0xf]
  %v33 = vld [vmem:[%s1 + $0x8] sm:$0xf]
  %v34 = vld [vmem:[%s1 + $0xc] sm:$0xf]
  %s35 = scalar_lea.vmem %s1, 16
  %v36 = vld [vmem:[%s35] sm:$0xf]
  %v37 = vld [vmem:[%s35 + $0x4] sm:$0xf]
  %v38 = vld [vmem:[%s35 + $0x8] sm:$0xf]
  %v39 = vld [vmem:[%s35 + $0xc] sm:$0xf]
  %v40 = vld [vmem:[%s6] sm:$0xff]
  %v41 = vld [vmem:[%s6 + $0x8] sm:$0xff]
  %v42 = vld [vmem:[%s6 + $0x10] sm:$0xff]
  %v43 = vld [vmem:[%s6 + $0x18] sm:$0xff]
  %v44 = vld [vmem:[%s6 + $0x20] sm:$0xff]
  %v45 = vld [vmem:[%s6 + $0x28] sm:$0xff]
  %v46 = vld [vmem:[%s6 + $0x30] sm:$0xff]
  %v47 = vld [vmem:[%s6 + $0x38] sm:$0xff]
  %v48 = vld [vmem:[%s6 + $0x40] sm:$0xff]
  %v49 = vld [vmem:[%s6 + $0x48] sm:$0xff]
  %v50 = vld [vmem:[%s6 + $0x50] sm:$0xff]
  %v51 = vld [vmem:[%s6 + $0x58] sm:$0xff]
  %v52 = vld [vmem:[%s6 + $0x60] sm:$0xff]
  %v53 = vld [vmem:[%s6 + $0x68] sm:$0xff]
  %v54 = vld [vmem:[%s6 + $0x70] sm:$0xff]
  %v55 = vld [vmem:[%s6 + $0x78] sm:$0xff]
  %v56 = vpack.c.bf16 %v28, %v27
  %v57 = vpack.c.bf16 %v30, %v29
  %v62 = vunpack.c.l.b16 %v31
  %v63 = vunpack.c.l.b16 %v32
  %v64 = vunpack.c.l.b16 %v33
  %v65 = vunpack.c.l.b16 %v34
  %v66 = vpack.c.b16 %v63, %v62
  %v67 = vpack.c.b16 %v65, %v64
  %vm68 = vcmask 261120
  %v70 = vsel %vm68, %v66, 0
  %v73 = vsel %vm68, %v67, 0
  %75 = vmatprep.subr.bf16.mxu0 0
  %76 = vmatpush1.bf16.msra.mxu0 %v56
  %77 = vmatprep.subr.bf16.mxu0 0
  %78 = vmatpush1.bf16.msra.mxu0 %v57
  %79 = vmatprep.subr.bf16.mxu0 0
  %80 = vmatpush1.bf16.msra.mxu0 0
  %81 = vmatprep.subr.bf16.mxu0 0
  %82 = vmatpush1.bf16.msra.mxu0 0
  %83 = vmatprep.subr.bf16.mxu0 0
  %84 = vmatpush1.bf16.msra.mxu0 0
  %85 = vmatprep.subr.bf16.mxu0 0
  %86 = vmatpush1.bf16.msra.mxu0 0
  %87 = vmatprep.subr.bf16.mxu0 0
  %88 = vmatpush1.bf16.msra.mxu0 0
  %89 = vmatprep.subr.bf16.mxu0 0
  %90 = vmatpush1.bf16.msra.mxu0 0
  %91 = vmatprep.subr.bf16.mxu0 0
  %92 = vmatpush1.bf16.msra.mxu0 0
  %93 = vmatprep.subr.bf16.mxu0 0
  %94 = vmatpush1.bf16.msra.mxu0 0
  %95 = vmatprep.subr.bf16.mxu0 0
  %96 = vmatpush1.bf16.msra.mxu0 0
  %97 = vmatprep.subr.bf16.mxu0 0
  %98 = vmatpush1.bf16.msra.mxu0 0
  %99 = vmatprep.subr.bf16.mxu0 0
  %100 = vmatpush1.bf16.msra.mxu0 0
  %101 = vmatprep.subr.bf16.mxu0 0
  %102 = vmatpush1.bf16.msra.mxu0 0
  %103 = vmatprep.subr.bf16.mxu0 0
  %104 = vmatpush1.bf16.msra.mxu0 0
  %105 = vmatprep.subr.bf16.mxu0 0
  %106 = vmatpush1.bf16.msra.mxu0 0
  %107 = vmatprep.mubr.bf16.mxu0 0
  %108 = vmatmul.mubr.bf16.gmra.mrb[0].mxu0 %v70
  %v109 = vpop.f32.mrb[0].mxu0
  %v110 = vadd.f32 0.0, %v109
  %v111 = vpop.f32.mrb[0].mxu0
  %v112 = vpop.f32.mrb[0].mxu0
  %v113 = vadd.f32 0.0, %v112
  %v114 = vpop.f32.mrb[0].mxu0
  %115 = vmatprep.mubr.bf16.mxu0 0
  %116 = vmatmul.mubr.bf16.gmra.mrb[0].mxu0 %v73
  %v117 = vpop.f32.mrb[0].mxu0
  %v118 = vadd.f32 0.0, %v117
  %v119 = vpop.f32.mrb[0].mxu0
  %v120 = vpop.f32.mrb[0].mxu0
  %v121 = vadd.f32 0.0, %v120
  %v122 = vpop.f32.mrb[0].mxu0
  %123 = vdwg.mxu0
  %v124 = vpack.c.bf16 %v113, %v110
  %v125 = vpack.c.bf16 %v121, %v118
  %v130 = vunpack.c.l.b16 %v36
  %v131 = vunpack.c.l.b16 %v37
  %v132 = vunpack.c.l.b16 %v38
  %v133 = vunpack.c.l.b16 %v39
  %v134 = vpack.c.b16 %v131, %v130
  %v135 = vpack.c.b16 %v133, %v132
  %v137 = vsel %vm68, %v134, 0
  %v140 = vsel %vm68, %v135, 0
  %142 = vmatprep.subr.bf16.mxu0 0
  %143 = vmatpush1.bf16.msra.mxu0 %v56
  %144 = vmatprep.subr.bf16.mxu0 0
  %145 = vmatpush1.bf16.msra.mxu0 %v57
  %146 = vmatprep.subr.bf16.mxu0 0
  %147 = vmatpush1.bf16.msra.mxu0 0
  %148 = vmatprep.subr.bf16.mxu0 0
  %149 = vmatpush1.bf16.msra.mxu0 0
  %150 = vmatprep.subr.bf16.mxu0 0
  %151 = vmatpush1.bf16.msra.mxu0 0
  %152 = vmatprep.subr.bf16.mxu0 0
  %153 = vmatpush1.bf16.msra.mxu0 0
  %154 = vmatprep.subr.bf16.mxu0 0
  %155 = vmatpush1.bf16.msra.mxu0 0
  %156 = vmatprep.subr.bf16.mxu0 0
  %157 = vmatpush1.bf16.msra.mxu0 0
  %158 = vmatprep.subr.bf16.mxu0 0
  %159 = vmatpush1.bf16.msra.mxu0 0
  %160 = vmatprep.subr.bf16.mxu0 0
  %161 = vmatpush1.bf16.msra.mxu0 0
  %162 = vmatprep.subr.bf16.mxu0 0
  %163 = vmatpush1.bf16.msra.mxu0 0
  %164 = vmatprep.subr.bf16.mxu0 0
  %165 = vmatpush1.bf16.msra.mxu0 0
  %166 = vmatprep.subr.bf16.mxu0 0
  %167 = vmatpush1.bf16.msra.mxu0 0
  %168 = vmatprep.subr.bf16.mxu0 0
  %169 = vmatpush1.bf16.msra.mxu0 0
  %170 = vmatprep.subr.bf16.mxu0 0
  %171 = vmatpush1.bf16.msra.mxu0 0
  %172 = vmatprep.subr.bf16.mxu0 0
  %173 = vmatpush1.bf16.msra.mxu0 0
  %174 = vmatprep.mubr.bf16.mxu0 0
  %175 = vmatmul.mubr.bf16.gmra.mrb[0].mxu0 %v137
  %v176 = vpop.f32.mrb[0].mxu0
  %v177 = vadd.f32 0.0, %v176
  %v178 = vpop.f32.mrb[0].mxu0
  %v179 = vpop.f32.mrb[0].mxu0
  %v180 = vadd.f32 0.0, %v179
  %v181 = vpop.f32.mrb[0].mxu0
  %182 = vmatprep.mubr.bf16.mxu0 0
  %183 = vmatmul.mubr.bf16.gmra.mrb[0].mxu0 %v140
  %v184 = vpop.f32.mrb[0].mxu0
  %v185 = vadd.f32 0.0, %v184
  %v186 = vpop.f32.mrb[0].mxu0
  %v187 = vpop.f32.mrb[0].mxu0
  %v188 = vadd.f32 0.0, %v187
  %v189 = vpop.f32.mrb[0].mxu0
  %190 = vdwg.mxu0
  %v191 = vpack.c.bf16 %v180, %v177
  %v192 = vpack.c.bf16 %v188, %v185
  %v193 = vld [vmem:[%s2] sm:$0xf]
  %v194 = vld [vmem:[%s2 + $0x4] sm:$0xf]
  %v195 = vld [vmem:[%s2 + $0x8] sm:$0xf]
  %v196 = vld [vmem:[%s2 + $0xc] sm:$0xf]
  %v197 = vld [vmem:[%s2 + $0x10] sm:$0xf]
  %v198 = vld [vmem:[%s2 + $0x14] sm:$0xf]
  %v199 = vld [vmem:[%s2 + $0x18] sm:$0xf]
  %v200 = vld [vmem:[%s2 + $0x1c] sm:$0xf]
  %v201 = vld [vmem:[%s2 + $0x20] sm:$0xf]
  %v202 = vld [vmem:[%s2 + $0x24] sm:$0xf]
  %v203 = vld [vmem:[%s2 + $0x28] sm:$0xf]
  %v204 = vld [vmem:[%s2 + $0x2c] sm:$0xf]
  %v205 = vld [vmem:[%s2 + $0x30] sm:$0xf]
  %v206 = vld [vmem:[%s2 + $0x34] sm:$0xf]
  %v207 = vld [vmem:[%s2 + $0x38] sm:$0xf]
  %v208 = vld [vmem:[%s2 + $0x3c] sm:$0xf]
  %s209 = scalar_lea.vmem %s2, 64
  %v210 = vld [vmem:[%s209] sm:$0xf]
  %v211 = vld [vmem:[%s209 + $0x4] sm:$0xf]
  %v212 = vld [vmem:[%s209 + $0x8] sm:$0xf]
  %v213 = vld [vmem:[%s209 + $0xc] sm:$0xf]
  %v214 = vld [vmem:[%s209 + $0x10] sm:$0xf]
  %v215 = vld [vmem:[%s209 + $0x14] sm:$0xf]
  %v216 = vld [vmem:[%s209 + $0x18] sm:$0xf]
  %v217 = vld [vmem:[%s209 + $0x1c] sm:$0xf]
  %v218 = vld [vmem:[%s209 + $0x20] sm:$0xf]
  %v219 = vld [vmem:[%s209 + $0x24] sm:$0xf]
  %v220 = vld [vmem:[%s209 + $0x28] sm:$0xf]
  %v221 = vld [vmem:[%s209 + $0x2c] sm:$0xf]
  %v222 = vld [vmem:[%s209 + $0x30] sm:$0xf]
  %v223 = vld [vmem:[%s209 + $0x34] sm:$0xf]
  %v224 = vld [vmem:[%s209 + $0x38] sm:$0xf]
  %v225 = vld [vmem:[%s209 + $0x3c] sm:$0xf]
  %v242 = vunpack.c.l.b16 %v210
  %v243 = vunpack.c.l.b16 %v211
  %v244 = vunpack.c.l.b16 %v212
  %v245 = vunpack.c.l.b16 %v213
  %v246 = vunpack.c.l.b16 %v214
  %v247 = vunpack.c.l.b16 %v215
  %v248 = vunpack.c.l.b16 %v216
  %v249 = vunpack.c.l.b16 %v217
  %v250 = vunpack.c.l.b16 %v218
  %v251 = vunpack.c.l.b16 %v219
  %v252 = vunpack.c.l.b16 %v220
  %v253 = vunpack.c.l.b16 %v221
  %v254 = vunpack.c.l.b16 %v222
  %v255 = vunpack.c.l.b16 %v223
  %v256 = vunpack.c.l.b16 %v224
  %v257 = vunpack.c.l.b16 %v225
  %v258 = vpack.c.b16 %v243, %v242
  %v259 = vpack.c.b16 %v245, %v244
  %v260 = vpack.c.b16 %v247, %v246
  %v261 = vpack.c.b16 %v249, %v248
  %v262 = vpack.c.b16 %v251, %v250
  %v263 = vpack.c.b16 %v253, %v252
  %v264 = vpack.c.b16 %v255, %v254
  %v265 = vpack.c.b16 %v257, %v256
  %274 = vmatprep.subr.bf16.mxu0 0
  %275 = vmatpush1.bf16.msra.mxu0 %v258
  %276 = vmatprep.subr.bf16.mxu0 0
  %277 = vmatpush1.bf16.msra.mxu0 %v259
  %278 = vmatprep.subr.bf16.mxu0 0
  %279 = vmatpush1.bf16.msra.mxu0 %v260
  %280 = vmatprep.subr.bf16.mxu0 0
  %281 = vmatpush1.bf16.msra.mxu0 %v261
  %282 = vmatprep.subr.bf16.mxu0 0
  %283 = vmatpush1.bf16.msra.mxu0 %v262
  %284 = vmatprep.subr.bf16.mxu0 0
  %285 = vmatpush1.bf16.msra.mxu0 %v263
  %286 = vmatprep.subr.bf16.mxu0 0
  %287 = vmatpush1.bf16.msra.mxu0 %v264
  %288 = vmatprep.subr.bf16.mxu0 0
  %289 = vmatpush1.bf16.msra.mxu0 %v265
  %290 = vmatprep.subr.bf16.mxu0 0
  %291 = vmatpush1.bf16.msra.mxu0 0
  %292 = vmatprep.subr.bf16.mxu0 0
  %293 = vmatpush1.bf16.msra.mxu0 0
  %294 = vmatprep.subr.bf16.mxu0 0
  %295 = vmatpush1.bf16.msra.mxu0 0
  %296 = vmatprep.subr.bf16.mxu0 0
  %297 = vmatpush1.bf16.msra.mxu0 0
  %298 = vmatprep.subr.bf16.mxu0 0
  %299 = vmatpush1.bf16.msra.mxu0 0
  %300 = vmatprep.subr.bf16.mxu0 0
  %301 = vmatpush1.bf16.msra.mxu0 0
  %302 = vmatprep.subr.bf16.mxu0 0
  %303 = vmatpush1.bf16.msra.mxu0 0
  %304 = vmatprep.subr.bf16.mxu0 0
  %305 = vmatpush1.bf16.msra.mxu0 0
  %306 = vmatprep.mubr.bf16.mxu0 0
  %307 = vmatmul.mubr.bf16.gmra.mrb[0].mxu0 %v56
  %v308 = vpop.f32.mrb[0].mxu0
  %v309 = vadd.f32 0.0, %v308
  %v310 = vpop.f32.mrb[0].mxu0
  %v311 = vpop.f32.mrb[0].mxu0
  %v312 = vadd.f32 0.0, %v311
  %v313 = vpop.f32.mrb[0].mxu0
  %314 = vmatprep.mubr.bf16.mxu0 0
  %315 = vmatmul.mubr.bf16.gmra.mrb[0].mxu0 %v57
  %v316 = vpop.f32.mrb[0].mxu0
  %v317 = vadd.f32 0.0, %v316
  %v318 = vpop.f32.mrb[0].mxu0
  %v319 = vpop.f32.mrb[0].mxu0
  %v320 = vadd.f32 0.0, %v319
  %v321 = vpop.f32.mrb[0].mxu0
  %322 = vdwg.mxu0
  %v339 = vunpack.c.l.b16 %v193
  %v340 = vunpack.c.l.b16 %v194
  %v341 = vunpack.c.l.b16 %v195
  %v342 = vunpack.c.l.b16 %v196
  %v343 = vunpack.c.l.b16 %v197
  %v344 = vunpack.c.l.b16 %v198
  %v345 = vunpack.c.l.b16 %v199
  %v346 = vunpack.c.l.b16 %v200
  %v347 = vunpack.c.l.b16 %v201
  %v348 = vunpack.c.l.b16 %v202
  %v349 = vunpack.c.l.b16 %v203
  %v350 = vunpack.c.l.b16 %v204
  %v351 = vunpack.c.l.b16 %v205
  %v352 = vunpack.c.l.b16 %v206
  %v353 = vunpack.c.l.b16 %v207
  %v354 = vunpack.c.l.b16 %v208
  %v355 = vpack.c.b16 %v340, %v339
  %v356 = vpack.c.b16 %v342, %v341
  %v357 = vpack.c.b16 %v344, %v343
  %v358 = vpack.c.b16 %v346, %v345
  %v359 = vpack.c.b16 %v348, %v347
  %v360 = vpack.c.b16 %v350, %v349
  %v361 = vpack.c.b16 %v352, %v351
  %v362 = vpack.c.b16 %v354, %v353
  %371 = vmatprep.subr.bf16.mxu0 0
  %372 = vmatpush1.bf16.msra.mxu0 %v355
  %373 = vmatprep.subr.bf16.mxu0 0
  %374 = vmatpush1.bf16.msra.mxu0 %v356
  %375 = vmatprep.subr.bf16.mxu0 0
  %376 = vmatpush1.bf16.msra.mxu0 %v357
  %377 = vmatprep.subr.bf16.mxu0 0
  %378 = vmatpush1.bf16.msra.mxu0 %v358
  %379 = vmatprep.subr.bf16.mxu0 0
  %380 = vmatpush1.bf16.msra.mxu0 %v359
  %381 = vmatprep.subr.bf16.mxu0 0
  %382 = vmatpush1.bf16.msra.mxu0 %v360
  %383 = vmatprep.subr.bf16.mxu0 0
  %384 = vmatpush1.bf16.msra.mxu0 %v361
  %385 = vmatprep.subr.bf16.mxu0 0
  %386 = vmatpush1.bf16.msra.mxu0 %v362
  %387 = vmatprep.subr.bf16.mxu0 0
  %388 = vmatpush1.bf16.msra.mxu0 0
  %389 = vmatprep.subr.bf16.mxu0 0
  %390 = vmatpush1.bf16.msra.mxu0 0
  %391 = vmatprep.subr.bf16.mxu0 0
  %392 = vmatpush1.bf16.msra.mxu0 0
  %393 = vmatprep.subr.bf16.mxu0 0
  %394 = vmatpush1.bf16.msra.mxu0 0
  %395 = vmatprep.subr.bf16.mxu0 0
  %396 = vmatpush1.bf16.msra.mxu0 0
  %397 = vmatprep.subr.bf16.mxu0 0
  %398 = vmatpush1.bf16.msra.mxu0 0
  %399 = vmatprep.subr.bf16.mxu0 0
  %400 = vmatpush1.bf16.msra.mxu0 0
  %401 = vmatprep.subr.bf16.mxu0 0
  %402 = vmatpush1.bf16.msra.mxu0 0
  %403 = vmatprep.mubr.bf16.mxu0 0
  %404 = vmatmul.mubr.bf16.gmra.mrb[0].mxu0 %v124
  %v405 = vpop.f32.mrb[0].mxu0
  %v406 = vadd.f32 %v309, %v405
  %v407 = vpop.f32.mrb[0].mxu0
  %v408 = vpop.f32.mrb[0].mxu0
  %v409 = vadd.f32 %v312, %v408
  %v410 = vpop.f32.mrb[0].mxu0
  %411 = vmatprep.mubr.bf16.mxu0 0
  %412 = vmatmul.mubr.bf16.gmra.mrb[0].mxu0 %v125
  %v413 = vpop.f32.mrb[0].mxu0
  %v414 = vadd.f32 %v317, %v413
  %v415 = vpop.f32.mrb[0].mxu0
  %v416 = vpop.f32.mrb[0].mxu0
  %v417 = vadd.f32 %v320, %v416
  %v418 = vpop.f32.mrb[0].mxu0
  %419 = vdwg.mxu0
  %s420 = scalar_lea.vmem %s2, 128
  %v421 = vld [vmem:[%s420] sm:$0xf]
  %v422 = vld [vmem:[%s420 + $0x4] sm:$0xf]
  %v423 = vld [vmem:[%s420 + $0x8] sm:$0xf]
  %v424 = vld [vmem:[%s420 + $0xc] sm:$0xf]
  %v425 = vld [vmem:[%s420 + $0x10] sm:$0xf]
  %v426 = vld [vmem:[%s420 + $0x14] sm:$0xf]
  %v427 = vld [vmem:[%s420 + $0x18] sm:$0xf]
  %v428 = vld [vmem:[%s420 + $0x1c] sm:$0xf]
  %v429 = vld [vmem:[%s420 + $0x20] sm:$0xf]
  %v430 = vld [vmem:[%s420 + $0x24] sm:$0xf]
  %v431 = vld [vmem:[%s420 + $0x28] sm:$0xf]
  %v432 = vld [vmem:[%s420 + $0x2c] sm:$0xf]
  %v433 = vld [vmem:[%s420 + $0x30] sm:$0xf]
  %v434 = vld [vmem:[%s420 + $0x34] sm:$0xf]
  %v435 = vld [vmem:[%s420 + $0x38] sm:$0xf]
  %v436 = vld [vmem:[%s420 + $0x3c] sm:$0xf]
  %v453 = vunpack.c.l.b16 %v421
  %v454 = vunpack.c.l.b16 %v422
  %v455 = vunpack.c.l.b16 %v423
  %v456 = vunpack.c.l.b16 %v424
  %v457 = vunpack.c.l.b16 %v425
  %v458 = vunpack.c.l.b16 %v426
  %v459 = vunpack.c.l.b16 %v427
  %v460 = vunpack.c.l.b16 %v428
  %v461 = vunpack.c.l.b16 %v429
  %v462 = vunpack.c.l.b16 %v430
  %v463 = vunpack.c.l.b16 %v431
  %v464 = vunpack.c.l.b16 %v432
  %v465 = vunpack.c.l.b16 %v433
  %v466 = vunpack.c.l.b16 %v434
  %v467 = vunpack.c.l.b16 %v435
  %v468 = vunpack.c.l.b16 %v436
  %v469 = vpack.c.b16 %v454, %v453
  %v470 = vpack.c.b16 %v456, %v455
  %v471 = vpack.c.b16 %v458, %v457
  %v472 = vpack.c.b16 %v460, %v459
  %v473 = vpack.c.b16 %v462, %v461
  %v474 = vpack.c.b16 %v464, %v463
  %v475 = vpack.c.b16 %v466, %v465
  %v476 = vpack.c.b16 %v468, %v467
  %485 = vmatprep.subr.bf16.mxu0 0
  %486 = vmatpush1.bf16.msra.mxu0 %v469
  %487 = vmatprep.subr.bf16.mxu0 0
  %488 = vmatpush1.bf16.msra.mxu0 %v470
  %489 = vmatprep.subr.bf16.mxu0 0
  %490 = vmatpush1.bf16.msra.mxu0 %v471
  %491 = vmatprep.subr.bf16.mxu0 0
  %492 = vmatpush1.bf16.msra.mxu0 %v472
  %493 = vmatprep.subr.bf16.mxu0 0
  %494 = vmatpush1.bf16.msra.mxu0 %v473
  %495 = vmatprep.subr.bf16.mxu0 0
  %496 = vmatpush1.bf16.msra.mxu0 %v474
  %497 = vmatprep.subr.bf16.mxu0 0
  %498 = vmatpush1.bf16.msra.mxu0 %v475
  %499 = vmatprep.subr.bf16.mxu0 0
  %500 = vmatpush1.bf16.msra.mxu0 %v476
  %501 = vmatprep.subr.bf16.mxu0 0
  %502 = vmatpush1.bf16.msra.mxu0 0
  %503 = vmatprep.subr.bf16.mxu0 0
  %504 = vmatpush1.bf16.msra.mxu0 0
  %505 = vmatprep.subr.bf16.mxu0 0
  %506 = vmatpush1.bf16.msra.mxu0 0
  %507 = vmatprep.subr.bf16.mxu0 0
  %508 = vmatpush1.bf16.msra.mxu0 0
  %509 = vmatprep.subr.bf16.mxu0 0
  %510 = vmatpush1.bf16.msra.mxu0 0
  %511 = vmatprep.subr.bf16.mxu0 0
  %512 = vmatpush1.bf16.msra.mxu0 0
  %513 = vmatprep.subr.bf16.mxu0 0
  %514 = vmatpush1.bf16.msra.mxu0 0
  %515 = vmatprep.subr.bf16.mxu0 0
  %516 = vmatpush1.bf16.msra.mxu0 0
  %517 = vmatprep.mubr.bf16.mxu0 0
  %518 = vmatmul.mubr.bf16.gmra.mrb[0].mxu0 %v191
  %v519 = vpop.f32.mrb[0].mxu0
  %v520 = vadd.f32 0.0, %v519
  %v521 = vpop.f32.mrb[0].mxu0
  %v522 = vpop.f32.mrb[0].mxu0
  %v523 = vadd.f32 0.0, %v522
  %v524 = vpop.f32.mrb[0].mxu0
  %525 = vmatprep.mubr.bf16.mxu0 0
  %526 = vmatmul.mubr.bf16.gmra.mrb[0].mxu0 %v192
  %v527 = vpop.f32.mrb[0].mxu0
  %v528 = vadd.f32 0.0, %v527
  %v529 = vpop.f32.mrb[0].mxu0
  %v530 = vpop.f32.mrb[0].mxu0
  %v531 = vadd.f32 0.0, %v530
  %v532 = vpop.f32.mrb[0].mxu0
  %533 = vdwg.mxu0
  %v534 = vadd.f32 %v406, %v520
  %v535 = vadd.f32 %v409, %v523
  %v536 = vadd.f32 %v414, %v528
  %v537 = vadd.f32 %v417, %v531
  %v538 = vld [vmem:[%s3] sm:$0x1]
  %v540 = vlaneseq
  %v541 = vshrl.u32 %v540, 7
  %v542 = vsub.s32 0, %v541
  %v543 = vrot.slane %v538, %v542
  %v545 = vadd.f32 %v534, %v543
  %v546 = vadd.f32 %v535, %v543
  %v547 = vadd.f32 %v536, %v543
  %v548 = vadd.f32 %v537, %v543
  %v549 = vadd.f32 %v545, %v546
  %v550 = vadd.f32 %v549, %v547
  %v551 = vadd.f32 %v550, %v548
  %v552 = vrot.slane %v551, 4
  %v553 = vadd.f32 %v551, %v552
  %v554 = vrot.slane %v553, 2
  %v555 = vadd.f32 %v553, %v554
  %v556 = vrot.slane %v555, 1
  %v557 = vadd.f32 %v555, %v556
  %558 = vmatprep.subr.mxu0 0.0
  %559 = vmatpush1.msra.mxu0 %v40
  %560 = vmatprep.subr.mxu0 0.0
  %561 = vmatpush1.msra.mxu0 %v41
  %562 = vmatprep.subr.mxu0 0.0
  %563 = vmatpush1.msra.mxu0 %v42
  %564 = vmatprep.subr.mxu0 0.0
  %565 = vmatpush1.msra.mxu0 %v43
  %566 = vmatprep.subr.mxu0 0.0
  %567 = vmatpush1.msra.mxu0 %v44
  %568 = vmatprep.subr.mxu0 0.0
  %569 = vmatpush1.msra.mxu0 %v45
  %570 = vmatprep.subr.mxu0 0.0
  %571 = vmatpush1.msra.mxu0 %v46
  %572 = vmatprep.subr.mxu0 0.0
  %573 = vmatpush1.msra.mxu0 %v47
  %574 = vmatprep.subr.mxu0 0.0
  %575 = vmatpush1.msra.mxu0 %v48
  %576 = vmatprep.subr.mxu0 0.0
  %577 = vmatpush1.msra.mxu0 %v49
  %578 = vmatprep.subr.mxu0 0.0
  %579 = vmatpush1.msra.mxu0 %v50
  %580 = vmatprep.subr.mxu0 0.0
  %581 = vmatpush1.msra.mxu0 %v51
  %582 = vmatprep.subr.mxu0 0.0
  %583 = vmatpush1.msra.mxu0 %v52
  %584 = vmatprep.subr.mxu0 0.0
  %585 = vmatpush1.msra.mxu0 %v53
  %586 = vmatprep.subr.mxu0 0.0
  %587 = vmatpush1.msra.mxu0 %v54
  %588 = vmatprep.subr.mxu0 0.0
  %589 = vmatpush1.msra.mxu0 %v55
  %590 = vmatprep.subr.mxu0 0.0
  %591 = vmatpush1.msra.mxu0 0.0
  %592 = vmatprep.subr.mxu0 0.0
  %593 = vmatpush1.msra.mxu0 0.0
  %594 = vmatprep.subr.mxu0 0.0
  %595 = vmatpush1.msra.mxu0 0.0
  %596 = vmatprep.subr.mxu0 0.0
  %597 = vmatpush1.msra.mxu0 0.0
  %598 = vmatprep.subr.mxu0 0.0
  %599 = vmatpush1.msra.mxu0 0.0
  %600 = vmatprep.subr.mxu0 0.0
  %601 = vmatpush1.msra.mxu0 0.0
  %602 = vmatprep.subr.mxu0 0.0
  %603 = vmatpush1.msra.mxu0 0.0
  %604 = vmatprep.subr.mxu0 0.0
  %605 = vmatpush1.msra.mxu0 0.0
  %606 = vmatprep.subr.mxu0 0.0
  %607 = vmatpush1.msra.mxu0 0.0
  %608 = vmatprep.subr.mxu0 0.0
  %609 = vmatpush1.msra.mxu0 0.0
  %610 = vmatprep.subr.mxu0 0.0
  %611 = vmatpush1.msra.mxu0 0.0
  %612 = vmatprep.subr.mxu0 0.0
  %613 = vmatpush1.msra.mxu0 0.0
  %614 = vmatprep.subr.mxu0 0.0
  %615 = vmatpush1.msra.mxu0 0.0
  %616 = vmatprep.subr.mxu0 0.0
  %617 = vmatpush1.msra.mxu0 0.0
  %618 = vmatprep.subr.mxu0 0.0
  %619 = vmatpush1.msra.mxu0 0.0
  %620 = vmatprep.subr.mxu0 0.0
  %621 = vmatpush1.msra.mxu0 0.0
  %622 = vmatprep.mubr.f32.mxu0 0.0
  %623 = vmatmul.mubr.f32.gmra.mrb[0].mxu0 %v557
  %v624 = vpop.f32.mrb[0].mxu0
  %v625 = vadd.f32 0.0, %v624
  %v626 = vpop.f32.mrb[0].mxu0
  %627 = vdwg.mxu0
  %v628 = vmul.f32 %v625, 0.001953125
  %v629 = vlaneseq
  %v630 = vshrl.u32 %v629, 7
  %v631 = vsub.s32 0, %v630
  %v632 = vrot.slane %v628, %v631
  %v633 = vsub.f32 %v545, %v632
  %v634 = vsub.f32 %v546, %v632
  %v635 = vsub.f32 %v547, %v632
  %v636 = vsub.f32 %v548, %v632
  %v637 = vmul.f32 %v633, %v633
  %v638 = vmul.f32 %v634, %v634
  %v639 = vmul.f32 %v635, %v635
  %v640 = vmul.f32 %v636, %v636
  %v641 = vadd.f32 %v637, %v638
  %v642 = vadd.f32 %v641, %v639
  %v643 = vadd.f32 %v642, %v640
  %v644 = vrot.slane %v643, 4
  %v645 = vadd.f32 %v643, %v644
  %v646 = vrot.slane %v645, 2
  %v647 = vadd.f32 %v645, %v646
  %v648 = vrot.slane %v647, 1
  %v649 = vadd.f32 %v647, %v648
  %650 = vmatprep.subr.mxu0 0.0
  %651 = vmatpush1.msra.mxu0 %v40
  %652 = vmatprep.subr.mxu0 0.0
  %653 = vmatpush1.msra.mxu0 %v41
  %654 = vmatprep.subr.mxu0 0.0
  %655 = vmatpush1.msra.mxu0 %v42
  %656 = vmatprep.subr.mxu0 0.0
  %657 = vmatpush1.msra.mxu0 %v43
  %658 = vmatprep.subr.mxu0 0.0
  %659 = vmatpush1.msra.mxu0 %v44
  %660 = vmatprep.subr.mxu0 0.0
  %661 = vmatpush1.msra.mxu0 %v45
  %662 = vmatprep.subr.mxu0 0.0
  %663 = vmatpush1.msra.mxu0 %v46
  %664 = vmatprep.subr.mxu0 0.0
  %665 = vmatpush1.msra.mxu0 %v47
  %666 = vmatprep.subr.mxu0 0.0
  %667 = vmatpush1.msra.mxu0 %v48
  %668 = vmatprep.subr.mxu0 0.0
  %669 = vmatpush1.msra.mxu0 %v49
  %670 = vmatprep.subr.mxu0 0.0
  %671 = vmatpush1.msra.mxu0 %v50
  %672 = vmatprep.subr.mxu0 0.0
  %673 = vmatpush1.msra.mxu0 %v51
  %674 = vmatprep.subr.mxu0 0.0
  %675 = vmatpush1.msra.mxu0 %v52
  %676 = vmatprep.subr.mxu0 0.0
  %677 = vmatpush1.msra.mxu0 %v53
  %678 = vmatprep.subr.mxu0 0.0
  %679 = vmatpush1.msra.mxu0 %v54
  %680 = vmatprep.subr.mxu0 0.0
  %681 = vmatpush1.msra.mxu0 %v55
  %682 = vmatprep.subr.mxu0 0.0
  %683 = vmatpush1.msra.mxu0 0.0
  %684 = vmatprep.subr.mxu0 0.0
  %685 = vmatpush1.msra.mxu0 0.0
  %686 = vmatprep.subr.mxu0 0.0
  %687 = vmatpush1.msra.mxu0 0.0
  %688 = vmatprep.subr.mxu0 0.0
  %689 = vmatpush1.msra.mxu0 0.0
  %690 = vmatprep.subr.mxu0 0.0
  %691 = vmatpush1.msra.mxu0 0.0
  %692 = vmatprep.subr.mxu0 0.0
  %693 = vmatpush1.msra.mxu0 0.0
  %694 = vmatprep.subr.mxu0 0.0
  %695 = vmatpush1.msra.mxu0 0.0
  %696 = vmatprep.subr.mxu0 0.0
  %697 = vmatpush1.msra.mxu0 0.0
  %698 = vmatprep.subr.mxu0 0.0
  %699 = vmatpush1.msra.mxu0 0.0
  %700 = vmatprep.subr.mxu0 0.0
  %701 = vmatpush1.msra.mxu0 0.0
  %702 = vmatprep.subr.mxu0 0.0
  %703 = vmatpush1.msra.mxu0 0.0
  %704 = vmatprep.subr.mxu0 0.0
  %705 = vmatpush1.msra.mxu0 0.0
  %706 = vmatprep.subr.mxu0 0.0
  %707 = vmatpush1.msra.mxu0 0.0
  %708 = vmatprep.subr.mxu0 0.0
  %709 = vmatpush1.msra.mxu0 0.0
  %710 = vmatprep.subr.mxu0 0.0
  %711 = vmatpush1.msra.mxu0 0.0
  %712 = vmatprep.subr.mxu0 0.0
  %713 = vmatpush1.msra.mxu0 0.0
  %714 = vmatprep.mubr.f32.mxu0 0.0
  %715 = vmatmul.mubr.f32.gmra.mrb[0].mxu0 %v649
  %v716 = vpop.f32.mrb[0].mxu0
  %v717 = vadd.f32 0.0, %v716
  %v718 = vpop.f32.mrb[0].mxu0
  %719 = vdwg.mxu0
  %v720 = vmul.f32 %v717, 0.001953125
  %v721 = vld [vmem:[%s4] sm:$0x1]
  %v722 = vadd.f32 %v720, 1e-05
  %v723 = vrsqrt.pop %v722
  %v724 = vmul.f32 %v721, %v723
  %v726 = vlaneseq
  %v727 = vshrl.u32 %v726, 7
  %v728 = vsub.s32 0, %v727
  %v729 = vrot.slane %v724, %v728
  %v731 = vmul.f32 %v633, %v729
  %v732 = vmul.f32 %v634, %v729
  %v733 = vmul.f32 %v635, %v729
  %v734 = vmul.f32 %v636, %v729
  %v735 = vld [vmem:[%s5] sm:$0x1]
  %v737 = vlaneseq
  %v738 = vshrl.u32 %v737, 7
  %v739 = vsub.s32 0, %v738
  %v740 = vrot.slane %v735, %v739
  %v742 = vadd.f32 %v731, %v740
  %v743 = vadd.f32 %v732, %v740
  %v744 = vadd.f32 %v733, %v740
  %v745 = vadd.f32 %v734, %v740
  %v746 = vmax.f32 %v742, 0.0
  %v747 = vmax.f32 %v743, 0.0
  %v748 = vmax.f32 %v744, 0.0
  %v749 = vmax.f32 %v745, 0.0
  %v750 = vpack.c.bf16 %v747, %v746
  %v751 = vpack.c.bf16 %v749, %v748
  %752 = vmatprep.subr.bf16.mxu0 0
  %753 = vmatpush1.bf16.msra.mxu0 %v750
  %754 = vmatprep.subr.bf16.mxu0 0
  %755 = vmatpush1.bf16.msra.mxu0 %v751
  %756 = vmatprep.subr.bf16.mxu0 0
  %757 = vmatpush1.bf16.msra.mxu0 0
  %758 = vmatprep.subr.bf16.mxu0 0
  %759 = vmatpush1.bf16.msra.mxu0 0
  %760 = vmatprep.subr.bf16.mxu0 0
  %761 = vmatpush1.bf16.msra.mxu0 0
  %762 = vmatprep.subr.bf16.mxu0 0
  %763 = vmatpush1.bf16.msra.mxu0 0
  %764 = vmatprep.subr.bf16.mxu0 0
  %765 = vmatpush1.bf16.msra.mxu0 0
  %766 = vmatprep.subr.bf16.mxu0 0
  %767 = vmatpush1.bf16.msra.mxu0 0
  %768 = vmatprep.subr.bf16.mxu0 0
  %769 = vmatpush1.bf16.msra.mxu0 0
  %770 = vmatprep.subr.bf16.mxu0 0
  %771 = vmatpush1.bf16.msra.mxu0 0
  %772 = vmatprep.subr.bf16.mxu0 0
  %773 = vmatpush1.bf16.msra.mxu0 0
  %774 = vmatprep.subr.bf16.mxu0 0
  %775 = vmatpush1.bf16.msra.mxu0 0
  %776 = vmatprep.subr.bf16.mxu0 0
  %777 = vmatpush1.bf16.msra.mxu0 0
  %778 = vmatprep.subr.bf16.mxu0 0
  %779 = vmatpush1.bf16.msra.mxu0 0
  %780 = vmatprep.subr.bf16.mxu0 0
  %781 = vmatpush1.bf16.msra.mxu0 0
  %782 = vmatprep.subr.bf16.mxu0 0
  %783 = vmatpush1.bf16.msra.mxu0 0
  %784 = vmatprep.mubr.bf16.mxu0 0
  %785 = vmatmul.mubr.bf16.gmra.mrb[0].mxu0 %v70
  %v786 = vpop.f32.mrb[0].mxu0
  %v787 = vadd.f32 0.0, %v786
  %v788 = vpop.f32.mrb[0].mxu0
  %v789 = vpop.f32.mrb[0].mxu0
  %v790 = vadd.f32 0.0, %v789
  %v791 = vpop.f32.mrb[0].mxu0
  %792 = vmatprep.mubr.bf16.mxu0 0
  %793 = vmatmul.mubr.bf16.gmra.mrb[0].mxu0 %v73
  %v794 = vpop.f32.mrb[0].mxu0
  %v795 = vadd.f32 0.0, %v794
  %v796 = vpop.f32.mrb[0].mxu0
  %v797 = vpop.f32.mrb[0].mxu0
  %v798 = vadd.f32 0.0, %v797
  %v799 = vpop.f32.mrb[0].mxu0
  %800 = vdwg.mxu0
  %v801 = vpack.c.bf16 %v790, %v787
  %v802 = vpack.c.bf16 %v798, %v795
  %803 = vmatprep.subr.bf16.mxu0 0
  %804 = vmatpush1.bf16.msra.mxu0 %v750
  %805 = vmatprep.subr.bf16.mxu0 0
  %806 = vmatpush1.bf16.msra.mxu0 %v751
  %807 = vmatprep.subr.bf16.mxu0 0
  %808 = vmatpush1.bf16.msra.mxu0 0
  %809 = vmatprep.subr.bf16.mxu0 0
  %810 = vmatpush1.bf16.msra.mxu0 0
  %811 = vmatprep.subr.bf16.mxu0 0
  %812 = vmatpush1.bf16.msra.mxu0 0
  %813 = vmatprep.subr.bf16.mxu0 0
  %814 = vmatpush1.bf16.msra.mxu0 0
  %815 = vmatprep.subr.bf16.mxu0 0
  %816 = vmatpush1.bf16.msra.mxu0 0
  %817 = vmatprep.subr.bf16.mxu0 0
  %818 = vmatpush1.bf16.msra.mxu0 0
  %819 = vmatprep.subr.bf16.mxu0 0
  %820 = vmatpush1.bf16.msra.mxu0 0
  %821 = vmatprep.subr.bf16.mxu0 0
  %822 = vmatpush1.bf16.msra.mxu0 0
  %823 = vmatprep.subr.bf16.mxu0 0
  %824 = vmatpush1.bf16.msra.mxu0 0
  %825 = vmatprep.subr.bf16.mxu0 0
  %826 = vmatpush1.bf16.msra.mxu0 0
  %827 = vmatprep.subr.bf16.mxu0 0
  %828 = vmatpush1.bf16.msra.mxu0 0
  %829 = vmatprep.subr.bf16.mxu0 0
  %830 = vmatpush1.bf16.msra.mxu0 0
  %831 = vmatprep.subr.bf16.mxu0 0
  %832 = vmatpush1.bf16.msra.mxu0 0
  %833 = vmatprep.subr.bf16.mxu0 0
  %834 = vmatpush1.bf16.msra.mxu0 0
  %835 = vmatprep.mubr.bf16.mxu0 0
  %836 = vmatmul.mubr.bf16.gmra.mrb[0].mxu0 %v137
  %v837 = vpop.f32.mrb[0].mxu0
  %v838 = vadd.f32 0.0, %v837
  %v839 = vpop.f32.mrb[0].mxu0
  %v840 = vpop.f32.mrb[0].mxu0
  %v841 = vadd.f32 0.0, %v840
  %v842 = vpop.f32.mrb[0].mxu0
  %843 = vmatprep.mubr.bf16.mxu0 0
  %844 = vmatmul.mubr.bf16.gmra.mrb[0].mxu0 %v140
  %v845 = vpop.f32.mrb[0].mxu0
  %v846 = vadd.f32 0.0, %v845
  %v847 = vpop.f32.mrb[0].mxu0
  %v848 = vpop.f32.mrb[0].mxu0
  %v849 = vadd.f32 0.0, %v848
  %v850 = vpop.f32.mrb[0].mxu0
  %851 = vdwg.mxu0
  %v852 = vpack.c.bf16 %v841, %v838
  %v853 = vpack.c.bf16 %v849, %v846
  %s854 = scalar_lea.vmem %s2, 192
  %v855 = vld [vmem:[%s854] sm:$0xf]
  %v856 = vld [vmem:[%s854 + $0x4] sm:$0xf]
  %v857 = vld [vmem:[%s854 + $0x8] sm:$0xf]
  %v858 = vld [vmem:[%s854 + $0xc] sm:$0xf]
  %v859 = vld [vmem:[%s854 + $0x10] sm:$0xf]
  %v860 = vld [vmem:[%s854 + $0x14] sm:$0xf]
  %v861 = vld [vmem:[%s854 + $0x18] sm:$0xf]
  %v862 = vld [vmem:[%s854 + $0x1c] sm:$0xf]
  %v863 = vld [vmem:[%s854 + $0x20] sm:$0xf]
  %v864 = vld [vmem:[%s854 + $0x24] sm:$0xf]
  %v865 = vld [vmem:[%s854 + $0x28] sm:$0xf]
  %v866 = vld [vmem:[%s854 + $0x2c] sm:$0xf]
  %v867 = vld [vmem:[%s854 + $0x30] sm:$0xf]
  %v868 = vld [vmem:[%s854 + $0x34] sm:$0xf]
  %v869 = vld [vmem:[%s854 + $0x38] sm:$0xf]
  %v870 = vld [vmem:[%s854 + $0x3c] sm:$0xf]
  %s871 = scalar_lea.vmem %s2, 256
  %v872 = vld [vmem:[%s871] sm:$0xf]
  %v873 = vld [vmem:[%s871 + $0x4] sm:$0xf]
  %v874 = vld [vmem:[%s871 + $0x8] sm:$0xf]
  %v875 = vld [vmem:[%s871 + $0xc] sm:$0xf]
  %v876 = vld [vmem:[%s871 + $0x10] sm:$0xf]
  %v877 = vld [vmem:[%s871 + $0x14] sm:$0xf]
  %v878 = vld [vmem:[%s871 + $0x18] sm:$0xf]
  %v879 = vld [vmem:[%s871 + $0x1c] sm:$0xf]
  %v880 = vld [vmem:[%s871 + $0x20] sm:$0xf]
  %v881 = vld [vmem:[%s871 + $0x24] sm:$0xf]
  %v882 = vld [vmem:[%s871 + $0x28] sm:$0xf]
  %v883 = vld [vmem:[%s871 + $0x2c] sm:$0xf]
  %v884 = vld [vmem:[%s871 + $0x30] sm:$0xf]
  %v885 = vld [vmem:[%s871 + $0x34] sm:$0xf]
  %v886 = vld [vmem:[%s871 + $0x38] sm:$0xf]
  %v887 = vld [vmem:[%s871 + $0x3c] sm:$0xf]
  %v904 = vunpack.c.l.b16 %v872
  %v905 = vunpack.c.l.b16 %v873
  %v906 = vunpack.c.l.b16 %v874
  %v907 = vunpack.c.l.b16 %v875
  %v908 = vunpack.c.l.b16 %v876
  %v909 = vunpack.c.l.b16 %v877
  %v910 = vunpack.c.l.b16 %v878
  %v911 = vunpack.c.l.b16 %v879
  %v912 = vunpack.c.l.b16 %v880
  %v913 = vunpack.c.l.b16 %v881
  %v914 = vunpack.c.l.b16 %v882
  %v915 = vunpack.c.l.b16 %v883
  %v916 = vunpack.c.l.b16 %v884
  %v917 = vunpack.c.l.b16 %v885
  %v918 = vunpack.c.l.b16 %v886
  %v919 = vunpack.c.l.b16 %v887
  %v920 = vpack.c.b16 %v905, %v904
  %v921 = vpack.c.b16 %v907, %v906
  %v922 = vpack.c.b16 %v909, %v908
  %v923 = vpack.c.b16 %v911, %v910
  %v924 = vpack.c.b16 %v913, %v912
  %v925 = vpack.c.b16 %v915, %v914
  %v926 = vpack.c.b16 %v917, %v916
  %v927 = vpack.c.b16 %v919, %v918
  %936 = vmatprep.subr.bf16.mxu0 0
  %937 = vmatpush1.bf16.msra.mxu0 %v920
  %938 = vmatprep.subr.bf16.mxu0 0
  %939 = vmatpush1.bf16.msra.mxu0 %v921
  %940 = vmatprep.subr.bf16.mxu0 0
  %941 = vmatpush1.bf16.msra.mxu0 %v922
  %942 = vmatprep.subr.bf16.mxu0 0
  %943 = vmatpush1.bf16.msra.mxu0 %v923
  %944 = vmatprep.subr.bf16.mxu0 0
  %945 = vmatpush1.bf16.msra.mxu0 %v924
  %946 = vmatprep.subr.bf16.mxu0 0
  %947 = vmatpush1.bf16.msra.mxu0 %v925
  %948 = vmatprep.subr.bf16.mxu0 0
  %949 = vmatpush1.bf16.msra.mxu0 %v926
  %950 = vmatprep.subr.bf16.mxu0 0
  %951 = vmatpush1.bf16.msra.mxu0 %v927
  %952 = vmatprep.subr.bf16.mxu0 0
  %953 = vmatpush1.bf16.msra.mxu0 0
  %954 = vmatprep.subr.bf16.mxu0 0
  %955 = vmatpush1.bf16.msra.mxu0 0
  %956 = vmatprep.subr.bf16.mxu0 0
  %957 = vmatpush1.bf16.msra.mxu0 0
  %958 = vmatprep.subr.bf16.mxu0 0
  %959 = vmatpush1.bf16.msra.mxu0 0
  %960 = vmatprep.subr.bf16.mxu0 0
  %961 = vmatpush1.bf16.msra.mxu0 0
  %962 = vmatprep.subr.bf16.mxu0 0
  %963 = vmatpush1.bf16.msra.mxu0 0
  %964 = vmatprep.subr.bf16.mxu0 0
  %965 = vmatpush1.bf16.msra.mxu0 0
  %966 = vmatprep.subr.bf16.mxu0 0
  %967 = vmatpush1.bf16.msra.mxu0 0
  %968 = vmatprep.mubr.bf16.mxu0 0
  %969 = vmatmul.mubr.bf16.gmra.mrb[0].mxu0 %v750
  %v970 = vpop.f32.mrb[0].mxu0
  %v971 = vadd.f32 0.0, %v970
  %v972 = vpop.f32.mrb[0].mxu0
  %v973 = vpop.f32.mrb[0].mxu0
  %v974 = vadd.f32 0.0, %v973
  %v975 = vpop.f32.mrb[0].mxu0
  %976 = vmatprep.mubr.bf16.mxu0 0
  %977 = vmatmul.mubr.bf16.gmra.mrb[0].mxu0 %v751
  %v978 = vpop.f32.mrb[0].mxu0
  %v979 = vadd.f32 0.0, %v978
  %v980 = vpop.f32.mrb[0].mxu0
  %v981 = vpop.f32.mrb[0].mxu0
  %v982 = vadd.f32 0.0, %v981
  %v983 = vpop.f32.mrb[0].mxu0
  %984 = vdwg.mxu0
  %v1001 = vunpack.c.l.b16 %v855
  %v1002 = vunpack.c.l.b16 %v856
  %v1003 = vunpack.c.l.b16 %v857
  %v1004 = vunpack.c.l.b16 %v858
  %v1005 = vunpack.c.l.b16 %v859
  %v1006 = vunpack.c.l.b16 %v860
  %v1007 = vunpack.c.l.b16 %v861
  %v1008 = vunpack.c.l.b16 %v862
  %v1009 = vunpack.c.l.b16 %v863
  %v1010 = vunpack.c.l.b16 %v864
  %v1011 = vunpack.c.l.b16 %v865
  %v1012 = vunpack.c.l.b16 %v866
  %v1013 = vunpack.c.l.b16 %v867
  %v1014 = vunpack.c.l.b16 %v868
  %v1015 = vunpack.c.l.b16 %v869
  %v1016 = vunpack.c.l.b16 %v870
  %v1017 = vpack.c.b16 %v1002, %v1001
  %v1018 = vpack.c.b16 %v1004, %v1003
  %v1019 = vpack.c.b16 %v1006, %v1005
  %v1020 = vpack.c.b16 %v1008, %v1007
  %v1021 = vpack.c.b16 %v1010, %v1009
  %v1022 = vpack.c.b16 %v1012, %v1011
  %v1023 = vpack.c.b16 %v1014, %v1013
  %v1024 = vpack.c.b16 %v1016, %v1015
  %1033 = vmatprep.subr.bf16.mxu0 0
  %1034 = vmatpush1.bf16.msra.mxu0 %v1017
  %1035 = vmatprep.subr.bf16.mxu0 0
  %1036 = vmatpush1.bf16.msra.mxu0 %v1018
  %1037 = vmatprep.subr.bf16.mxu0 0
  %1038 = vmatpush1.bf16.msra.mxu0 %v1019
  %1039 = vmatprep.subr.bf16.mxu0 0
  %1040 = vmatpush1.bf16.msra.mxu0 %v1020
  %1041 = vmatprep.subr.bf16.mxu0 0
  %1042 = vmatpush1.bf16.msra.mxu0 %v1021
  %1043 = vmatprep.subr.bf16.mxu0 0
  %1044 = vmatpush1.bf16.msra.mxu0 %v1022
  %1045 = vmatprep.subr.bf16.mxu0 0
  %1046 = vmatpush1.bf16.msra.mxu0 %v1023
  %1047 = vmatprep.subr.bf16.mxu0 0
  %1048 = vmatpush1.bf16.msra.mxu0 %v1024
  %1049 = vmatprep.subr.bf16.mxu0 0
  %1050 = vmatpush1.bf16.msra.mxu0 0
  %1051 = vmatprep.subr.bf16.mxu0 0
  %1052 = vmatpush1.bf16.msra.mxu0 0
  %1053 = vmatprep.subr.bf16.mxu0 0
  %1054 = vmatpush1.bf16.msra.mxu0 0
  %1055 = vmatprep.subr.bf16.mxu0 0
  %1056 = vmatpush1.bf16.msra.mxu0 0
  %1057 = vmatprep.subr.bf16.mxu0 0
  %1058 = vmatpush1.bf16.msra.mxu0 0
  %1059 = vmatprep.subr.bf16.mxu0 0
  %1060 = vmatpush1.bf16.msra.mxu0 0
  %1061 = vmatprep.subr.bf16.mxu0 0
  %1062 = vmatpush1.bf16.msra.mxu0 0
  %1063 = vmatprep.subr.bf16.mxu0 0
  %1064 = vmatpush1.bf16.msra.mxu0 0
  %1065 = vmatprep.mubr.bf16.mxu0 0
  %1066 = vmatmul.mubr.bf16.gmra.mrb[0].mxu0 %v801
  %v1067 = vpop.f32.mrb[0].mxu0
  %v1068 = vadd.f32 %v971, %v1067
  %v1069 = vpop.f32.mrb[0].mxu0
  %v1070 = vpop.f32.mrb[0].mxu0
  %v1071 = vadd.f32 %v974, %v1070
  %v1072 = vpop.f32.mrb[0].mxu0
  %1073 = vmatprep.mubr.bf16.mxu0 0
  %1074 = vmatmul.mubr.bf16.gmra.mrb[0].mxu0 %v802
  %v1075 = vpop.f32.mrb[0].mxu0
  %v1076 = vadd.f32 %v979, %v1075
  %v1077 = vpop.f32.mrb[0].mxu0
  %v1078 = vpop.f32.mrb[0].mxu0
  %v1079 = vadd.f32 %v982, %v1078
  %v1080 = vpop.f32.mrb[0].mxu0
  %1081 = vdwg.mxu0
  %s1082 = scalar_lea.vmem %s2, 320
  %v1083 = vld [vmem:[%s1082] sm:$0xf]
  %v1084 = vld [vmem:[%s1082 + $0x4] sm:$0xf]
  %v1085 = vld [vmem:[%s1082 + $0x8] sm:$0xf]
  %v1086 = vld [vmem:[%s1082 + $0xc] sm:$0xf]
  %v1087 = vld [vmem:[%s1082 + $0x10] sm:$0xf]
  %v1088 = vld [vmem:[%s1082 + $0x14] sm:$0xf]
  %v1089 = vld [vmem:[%s1082 + $0x18] sm:$0xf]
  %v1090 = vld [vmem:[%s1082 + $0x1c] sm:$0xf]
  %v1091 = vld [vmem:[%s1082 + $0x20] sm:$0xf]
  %v1092 = vld [vmem:[%s1082 + $0x24] sm:$0xf]
  %v1093 = vld [vmem:[%s1082 + $0x28] sm:$0xf]
  %v1094 = vld [vmem:[%s1082 + $0x2c] sm:$0xf]
  %v1095 = vld [vmem:[%s1082 + $0x30] sm:$0xf]
  %v1096 = vld [vmem:[%s1082 + $0x34] sm:$0xf]
  %v1097 = vld [vmem:[%s1082 + $0x38] sm:$0xf]
  %v1098 = vld [vmem:[%s1082 + $0x3c] sm:$0xf]
  %v1115 = vunpack.c.l.b16 %v1083
  %v1116 = vunpack.c.l.b16 %v1084
  %v1117 = vunpack.c.l.b16 %v1085
  %v1118 = vunpack.c.l.b16 %v1086
  %v1119 = vunpack.c.l.b16 %v1087
  %v1120 = vunpack.c.l.b16 %v1088
  %v1121 = vunpack.c.l.b16 %v1089
  %v1122 = vunpack.c.l.b16 %v1090
  %v1123 = vunpack.c.l.b16 %v1091
  %v1124 = vunpack.c.l.b16 %v1092
  %v1125 = vunpack.c.l.b16 %v1093
  %v1126 = vunpack.c.l.b16 %v1094
  %v1127 = vunpack.c.l.b16 %v1095
  %v1128 = vunpack.c.l.b16 %v1096
  %v1129 = vunpack.c.l.b16 %v1097
  %v1130 = vunpack.c.l.b16 %v1098
  %v1131 = vpack.c.b16 %v1116, %v1115
  %v1132 = vpack.c.b16 %v1118, %v1117
  %v1133 = vpack.c.b16 %v1120, %v1119
  %v1134 = vpack.c.b16 %v1122, %v1121
  %v1135 = vpack.c.b16 %v1124, %v1123
  %v1136 = vpack.c.b16 %v1126, %v1125
  %v1137 = vpack.c.b16 %v1128, %v1127
  %v1138 = vpack.c.b16 %v1130, %v1129
  %1147 = vmatprep.subr.bf16.mxu0 0
  %1148 = vmatpush1.bf16.msra.mxu0 %v1131
  %1149 = vmatprep.subr.bf16.mxu0 0
  %1150 = vmatpush1.bf16.msra.mxu0 %v1132
  %1151 = vmatprep.subr.bf16.mxu0 0
  %1152 = vmatpush1.bf16.msra.mxu0 %v1133
  %1153 = vmatprep.subr.bf16.mxu0 0
  %1154 = vmatpush1.bf16.msra.mxu0 %v1134
  %1155 = vmatprep.subr.bf16.mxu0 0
  %1156 = vmatpush1.bf16.msra.mxu0 %v1135
  %1157 = vmatprep.subr.bf16.mxu0 0
  %1158 = vmatpush1.bf16.msra.mxu0 %v1136
  %1159 = vmatprep.subr.bf16.mxu0 0
  %1160 = vmatpush1.bf16.msra.mxu0 %v1137
  %1161 = vmatprep.subr.bf16.mxu0 0
  %1162 = vmatpush1.bf16.msra.mxu0 %v1138
  %1163 = vmatprep.subr.bf16.mxu0 0
  %1164 = vmatpush1.bf16.msra.mxu0 0
  %1165 = vmatprep.subr.bf16.mxu0 0
  %1166 = vmatpush1.bf16.msra.mxu0 0
  %1167 = vmatprep.subr.bf16.mxu0 0
  %1168 = vmatpush1.bf16.msra.mxu0 0
  %1169 = vmatprep.subr.bf16.mxu0 0
  %1170 = vmatpush1.bf16.msra.mxu0 0
  %1171 = vmatprep.subr.bf16.mxu0 0
  %1172 = vmatpush1.bf16.msra.mxu0 0
  %1173 = vmatprep.subr.bf16.mxu0 0
  %1174 = vmatpush1.bf16.msra.mxu0 0
  %1175 = vmatprep.subr.bf16.mxu0 0
  %1176 = vmatpush1.bf16.msra.mxu0 0
  %1177 = vmatprep.subr.bf16.mxu0 0
  %1178 = vmatpush1.bf16.msra.mxu0 0
  %1179 = vmatprep.mubr.bf16.mxu0 0
  %1180 = vmatmul.mubr.bf16.gmra.mrb[0].mxu0 %v852
  %v1181 = vpop.f32.mrb[0].mxu0
  %v1182 = vadd.f32 0.0, %v1181
  %v1183 = vpop.f32.mrb[0].mxu0
  %v1184 = vpop.f32.mrb[0].mxu0
  %v1185 = vadd.f32 0.0, %v1184
  %v1186 = vpop.f32.mrb[0].mxu0
  %1187 = vmatprep.mubr.bf16.mxu0 0
  %1188 = vmatmul.mubr.bf16.gmra.mrb[0].mxu0 %v853
  %v1189 = vpop.f32.mrb[0].mxu0
  %v1190 = vadd.f32 0.0, %v1189
  %v1191 = vpop.f32.mrb[0].mxu0
  %v1192 = vpop.f32.mrb[0].mxu0
  %v1193 = vadd.f32 0.0, %v1192
  %v1194 = vpop.f32.mrb[0].mxu0
  %1195 = vdwg.mxu0
  %v1196 = vadd.f32 %v1068, %v1182
  %v1197 = vadd.f32 %v1071, %v1185
  %v1198 = vadd.f32 %v1076, %v1190
  %v1199 = vadd.f32 %v1079, %v1193
  %s1200 = scalar_lea.vmem %s3, 1
  %v1201 = vld [vmem:[%s1200] sm:$0x1]
  %v1203 = vlaneseq
  %v1204 = vshrl.u32 %v1203, 7
  %v1205 = vsub.s32 0, %v1204
  %v1206 = vrot.slane %v1201, %v1205
  %v1208 = vadd.f32 %v1196, %v1206
  %v1209 = vadd.f32 %v1197, %v1206
  %v1210 = vadd.f32 %v1198, %v1206
  %v1211 = vadd.f32 %v1199, %v1206
  %v1212 = vadd.f32 %v1208, %v1209
  %v1213 = vadd.f32 %v1212, %v1210
  %v1214 = vadd.f32 %v1213, %v1211
  %v1215 = vrot.slane %v1214, 4
  %v1216 = vadd.f32 %v1214, %v1215
  %v1217 = vrot.slane %v1216, 2
  %v1218 = vadd.f32 %v1216, %v1217
  %v1219 = vrot.slane %v1218, 1
  %v1220 = vadd.f32 %v1218, %v1219
  %1221 = vmatprep.subr.mxu0 0.0
  %1222 = vmatpush1.msra.mxu0 %v40
  %1223 = vmatprep.subr.mxu0 0.0
  %1224 = vmatpush1.msra.mxu0 %v41
  %1225 = vmatprep.subr.mxu0 0.0
  %1226 = vmatpush1.msra.mxu0 %v42
  %1227 = vmatprep.subr.mxu0 0.0
  %1228 = vmatpush1.msra.mxu0 %v43
  %1229 = vmatprep.subr.mxu0 0.0
  %1230 = vmatpush1.msra.mxu0 %v44
  %1231 = vmatprep.subr.mxu0 0.0
  %1232 = vmatpush1.msra.mxu0 %v45
  %1233 = vmatprep.subr.mxu0 0.0
  %1234 = vmatpush1.msra.mxu0 %v46
  %1235 = vmatprep.subr.mxu0 0.0
  %1236 = vmatpush1.msra.mxu0 %v47
  %1237 = vmatprep.subr.mxu0 0.0
  %1238 = vmatpush1.msra.mxu0 %v48
  %1239 = vmatprep.subr.mxu0 0.0
  %1240 = vmatpush1.msra.mxu0 %v49
  %1241 = vmatprep.subr.mxu0 0.0
  %1242 = vmatpush1.msra.mxu0 %v50
  %1243 = vmatprep.subr.mxu0 0.0
  %1244 = vmatpush1.msra.mxu0 %v51
  %1245 = vmatprep.subr.mxu0 0.0
  %1246 = vmatpush1.msra.mxu0 %v52
  %1247 = vmatprep.subr.mxu0 0.0
  %1248 = vmatpush1.msra.mxu0 %v53
  %1249 = vmatprep.subr.mxu0 0.0
  %1250 = vmatpush1.msra.mxu0 %v54
  %1251 = vmatprep.subr.mxu0 0.0
  %1252 = vmatpush1.msra.mxu0 %v55
  %1253 = vmatprep.subr.mxu0 0.0
  %1254 = vmatpush1.msra.mxu0 0.0
  %1255 = vmatprep.subr.mxu0 0.0
  %1256 = vmatpush1.msra.mxu0 0.0
  %1257 = vmatprep.subr.mxu0 0.0
  %1258 = vmatpush1.msra.mxu0 0.0
  %1259 = vmatprep.subr.mxu0 0.0
  %1260 = vmatpush1.msra.mxu0 0.0
  %1261 = vmatprep.subr.mxu0 0.0
  %1262 = vmatpush1.msra.mxu0 0.0
  %1263 = vmatprep.subr.mxu0 0.0
  %1264 = vmatpush1.msra.mxu0 0.0
  %1265 = vmatprep.subr.mxu0 0.0
  %1266 = vmatpush1.msra.mxu0 0.0
  %1267 = vmatprep.subr.mxu0 0.0
  %1268 = vmatpush1.msra.mxu0 0.0
  %1269 = vmatprep.subr.mxu0 0.0
  %1270 = vmatpush1.msra.mxu0 0.0
  %1271 = vmatprep.subr.mxu0 0.0
  %1272 = vmatpush1.msra.mxu0 0.0
  %1273 = vmatprep.subr.mxu0 0.0
  %1274 = vmatpush1.msra.mxu0 0.0
  %1275 = vmatprep.subr.mxu0 0.0
  %1276 = vmatpush1.msra.mxu0 0.0
  %1277 = vmatprep.subr.mxu0 0.0
  %1278 = vmatpush1.msra.mxu0 0.0
  %1279 = vmatprep.subr.mxu0 0.0
  %1280 = vmatpush1.msra.mxu0 0.0
  %1281 = vmatprep.subr.mxu0 0.0
  %1282 = vmatpush1.msra.mxu0 0.0
  %1283 = vmatprep.subr.mxu0 0.0
  %1284 = vmatpush1.msra.mxu0 0.0
  %1285 = vmatprep.mubr.f32.mxu0 0.0
  %1286 = vmatmul.mubr.f32.gmra.mrb[0].mxu0 %v1220
  %v1287 = vpop.f32.mrb[0].mxu0
  %v1288 = vadd.f32 0.0, %v1287
  %v1289 = vpop.f32.mrb[0].mxu0
  %1290 = vdwg.mxu0
  %v1291 = vmul.f32 %v1288, 0.001953125
  %v1292 = vlaneseq
  %v1293 = vshrl.u32 %v1292, 7
  %v1294 = vsub.s32 0, %v1293
  %v1295 = vrot.slane %v1291, %v1294
  %v1296 = vsub.f32 %v1208, %v1295
  %v1297 = vsub.f32 %v1209, %v1295
  %v1298 = vsub.f32 %v1210, %v1295
  %v1299 = vsub.f32 %v1211, %v1295
  %v1300 = vmul.f32 %v1296, %v1296
  %v1301 = vmul.f32 %v1297, %v1297
  %v1302 = vmul.f32 %v1298, %v1298
  %v1303 = vmul.f32 %v1299, %v1299
  %v1304 = vadd.f32 %v1300, %v1301
  %v1305 = vadd.f32 %v1304, %v1302
  %v1306 = vadd.f32 %v1305, %v1303
  %v1307 = vrot.slane %v1306, 4
  %v1308 = vadd.f32 %v1306, %v1307
  %v1309 = vrot.slane %v1308, 2
  %v1310 = vadd.f32 %v1308, %v1309
  %v1311 = vrot.slane %v1310, 1
  %v1312 = vadd.f32 %v1310, %v1311
  %1313 = vmatprep.subr.mxu0 0.0
  %1314 = vmatpush1.msra.mxu0 %v40
  %1315 = vmatprep.subr.mxu0 0.0
  %1316 = vmatpush1.msra.mxu0 %v41
  %1317 = vmatprep.subr.mxu0 0.0
  %1318 = vmatpush1.msra.mxu0 %v42
  %1319 = vmatprep.subr.mxu0 0.0
  %1320 = vmatpush1.msra.mxu0 %v43
  %1321 = vmatprep.subr.mxu0 0.0
  %1322 = vmatpush1.msra.mxu0 %v44
  %1323 = vmatprep.subr.mxu0 0.0
  %1324 = vmatpush1.msra.mxu0 %v45
  %1325 = vmatprep.subr.mxu0 0.0
  %1326 = vmatpush1.msra.mxu0 %v46
  %1327 = vmatprep.subr.mxu0 0.0
  %1328 = vmatpush1.msra.mxu0 %v47
  %1329 = vmatprep.subr.mxu0 0.0
  %1330 = vmatpush1.msra.mxu0 %v48
  %1331 = vmatprep.subr.mxu0 0.0
  %1332 = vmatpush1.msra.mxu0 %v49
  %1333 = vmatprep.subr.mxu0 0.0
  %1334 = vmatpush1.msra.mxu0 %v50
  %1335 = vmatprep.subr.mxu0 0.0
  %1336 = vmatpush1.msra.mxu0 %v51
  %1337 = vmatprep.subr.mxu0 0.0
  %1338 = vmatpush1.msra.mxu0 %v52
  %1339 = vmatprep.subr.mxu0 0.0
  %1340 = vmatpush1.msra.mxu0 %v53
  %1341 = vmatprep.subr.mxu0 0.0
  %1342 = vmatpush1.msra.mxu0 %v54
  %1343 = vmatprep.subr.mxu0 0.0
  %1344 = vmatpush1.msra.mxu0 %v55
  %1345 = vmatprep.subr.mxu0 0.0
  %1346 = vmatpush1.msra.mxu0 0.0
  %1347 = vmatprep.subr.mxu0 0.0
  %1348 = vmatpush1.msra.mxu0 0.0
  %1349 = vmatprep.subr.mxu0 0.0
  %1350 = vmatpush1.msra.mxu0 0.0
  %1351 = vmatprep.subr.mxu0 0.0
  %1352 = vmatpush1.msra.mxu0 0.0
  %1353 = vmatprep.subr.mxu0 0.0
  %1354 = vmatpush1.msra.mxu0 0.0
  %1355 = vmatprep.subr.mxu0 0.0
  %1356 = vmatpush1.msra.mxu0 0.0
  %1357 = vmatprep.subr.mxu0 0.0
  %1358 = vmatpush1.msra.mxu0 0.0
  %1359 = vmatprep.subr.mxu0 0.0
  %1360 = vmatpush1.msra.mxu0 0.0
  %1361 = vmatprep.subr.mxu0 0.0
  %1362 = vmatpush1.msra.mxu0 0.0
  %1363 = vmatprep.subr.mxu0 0.0
  %1364 = vmatpush1.msra.mxu0 0.0
  %1365 = vmatprep.subr.mxu0 0.0
  %1366 = vmatpush1.msra.mxu0 0.0
  %1367 = vmatprep.subr.mxu0 0.0
  %1368 = vmatpush1.msra.mxu0 0.0
  %1369 = vmatprep.subr.mxu0 0.0
  %1370 = vmatpush1.msra.mxu0 0.0
  %1371 = vmatprep.subr.mxu0 0.0
  %1372 = vmatpush1.msra.mxu0 0.0
  %1373 = vmatprep.subr.mxu0 0.0
  %1374 = vmatpush1.msra.mxu0 0.0
  %1375 = vmatprep.subr.mxu0 0.0
  %1376 = vmatpush1.msra.mxu0 0.0
  %1377 = vmatprep.mubr.f32.mxu0 0.0
  %1378 = vmatmul.mubr.f32.gmra.mrb[0].mxu0 %v1312
  %v1379 = vpop.f32.mrb[0].mxu0
  %v1380 = vadd.f32 0.0, %v1379
  %v1381 = vpop.f32.mrb[0].mxu0
  %1382 = vdwg.mxu0
  %v1383 = vmul.f32 %v1380, 0.001953125
  %s1384 = scalar_lea.vmem %s4, 1
  %v1385 = vld [vmem:[%s1384] sm:$0x1]
  %v1386 = vadd.f32 %v1383, 1e-05
  %v1387 = vrsqrt.pop %v1386
  %v1388 = vmul.f32 %v1385, %v1387
  %v1390 = vlaneseq
  %v1391 = vshrl.u32 %v1390, 7
  %v1392 = vsub.s32 0, %v1391
  %v1393 = vrot.slane %v1388, %v1392
  %v1395 = vmul.f32 %v1296, %v1393
  %v1396 = vmul.f32 %v1297, %v1393
  %v1397 = vmul.f32 %v1298, %v1393
  %v1398 = vmul.f32 %v1299, %v1393
  %s1399 = scalar_lea.vmem %s5, 1
  %v1400 = vld [vmem:[%s1399] sm:$0x1]
  %v1402 = vlaneseq
  %v1403 = vshrl.u32 %v1402, 7
  %v1404 = vsub.s32 0, %v1403
  %v1405 = vrot.slane %v1400, %v1404
  %v1407 = vadd.f32 %v1395, %v1405
  %v1408 = vadd.f32 %v1396, %v1405
  %v1409 = vadd.f32 %v1397, %v1405
  %v1410 = vadd.f32 %v1398, %v1405
  %v1411 = vmax.f32 %v1407, 0.0
  %v1412 = vmax.f32 %v1408, 0.0
  %v1413 = vmax.f32 %v1409, 0.0
  %v1414 = vmax.f32 %v1410, 0.0
  %v1415 = vpack.c.bf16 %v1412, %v1411
  %v1416 = vpack.c.bf16 %v1414, %v1413
  %1417 = vmatprep.subr.bf16.mxu0 0
  %1418 = vmatpush1.bf16.msra.mxu0 %v1415
  %1419 = vmatprep.subr.bf16.mxu0 0
  %1420 = vmatpush1.bf16.msra.mxu0 %v1416
  %1421 = vmatprep.subr.bf16.mxu0 0
  %1422 = vmatpush1.bf16.msra.mxu0 0
  %1423 = vmatprep.subr.bf16.mxu0 0
  %1424 = vmatpush1.bf16.msra.mxu0 0
  %1425 = vmatprep.subr.bf16.mxu0 0
  %1426 = vmatpush1.bf16.msra.mxu0 0
  %1427 = vmatprep.subr.bf16.mxu0 0
  %1428 = vmatpush1.bf16.msra.mxu0 0
  %1429 = vmatprep.subr.bf16.mxu0 0
  %1430 = vmatpush1.bf16.msra.mxu0 0
  %1431 = vmatprep.subr.bf16.mxu0 0
  %1432 = vmatpush1.bf16.msra.mxu0 0
  %1433 = vmatprep.subr.bf16.mxu0 0
  %1434 = vmatpush1.bf16.msra.mxu0 0
  %1435 = vmatprep.subr.bf16.mxu0 0
  %1436 = vmatpush1.bf16.msra.mxu0 0
  %1437 = vmatprep.subr.bf16.mxu0 0
  %1438 = vmatpush1.bf16.msra.mxu0 0
  %1439 = vmatprep.subr.bf16.mxu0 0
  %1440 = vmatpush1.bf16.msra.mxu0 0
  %1441 = vmatprep.subr.bf16.mxu0 0
  %1442 = vmatpush1.bf16.msra.mxu0 0
  %1443 = vmatprep.subr.bf16.mxu0 0
  %1444 = vmatpush1.bf16.msra.mxu0 0
  %1445 = vmatprep.subr.bf16.mxu0 0
  %1446 = vmatpush1.bf16.msra.mxu0 0
  %1447 = vmatprep.subr.bf16.mxu0 0
  %1448 = vmatpush1.bf16.msra.mxu0 0
  %1449 = vmatprep.mubr.bf16.mxu0 0
  %1450 = vmatmul.mubr.bf16.gmra.mrb[0].mxu0 %v70
  %v1451 = vpop.f32.mrb[0].mxu0
  %v1452 = vadd.f32 0.0, %v1451
  %v1453 = vpop.f32.mrb[0].mxu0
  %v1454 = vpop.f32.mrb[0].mxu0
  %v1455 = vadd.f32 0.0, %v1454
  %v1456 = vpop.f32.mrb[0].mxu0
  %1457 = vmatprep.mubr.bf16.mxu0 0
  %1458 = vmatmul.mubr.bf16.gmra.mrb[0].mxu0 %v73
  %v1459 = vpop.f32.mrb[0].mxu0
  %v1460 = vadd.f32 0.0, %v1459
  %v1461 = vpop.f32.mrb[0].mxu0
  %v1462 = vpop.f32.mrb[0].mxu0
  %v1463 = vadd.f32 0.0, %v1462
  %v1464 = vpop.f32.mrb[0].mxu0
  %1465 = vdwg.mxu0
  %v1466 = vpack.c.bf16 %v1455, %v1452
  %v1467 = vpack.c.bf16 %v1463, %v1460
  %1468 = vmatprep.subr.bf16.mxu0 0
  %1469 = vmatpush1.bf16.msra.mxu0 %v1415
  %1470 = vmatprep.subr.bf16.mxu0 0
  %1471 = vmatpush1.bf16.msra.mxu0 %v1416
  %1472 = vmatprep.subr.bf16.mxu0 0
  %1473 = vmatpush1.bf16.msra.mxu0 0
  %1474 = vmatprep.subr.bf16.mxu0 0
  %1475 = vmatpush1.bf16.msra.mxu0 0
  %1476 = vmatprep.subr.bf16.mxu0 0
  %1477 = vmatpush1.bf16.msra.mxu0 0
  %1478 = vmatprep.subr.bf16.mxu0 0
  %1479 = vmatpush1.bf16.msra.mxu0 0
  %1480 = vmatprep.subr.bf16.mxu0 0
  %1481 = vmatpush1.bf16.msra.mxu0 0
  %1482 = vmatprep.subr.bf16.mxu0 0
  %1483 = vmatpush1.bf16.msra.mxu0 0
  %1484 = vmatprep.subr.bf16.mxu0 0
  %1485 = vmatpush1.bf16.msra.mxu0 0
  %1486 = vmatprep.subr.bf16.mxu0 0
  %1487 = vmatpush1.bf16.msra.mxu0 0
  %1488 = vmatprep.subr.bf16.mxu0 0
  %1489 = vmatpush1.bf16.msra.mxu0 0
  %1490 = vmatprep.subr.bf16.mxu0 0
  %1491 = vmatpush1.bf16.msra.mxu0 0
  %1492 = vmatprep.subr.bf16.mxu0 0
  %1493 = vmatpush1.bf16.msra.mxu0 0
  %1494 = vmatprep.subr.bf16.mxu0 0
  %1495 = vmatpush1.bf16.msra.mxu0 0
  %1496 = vmatprep.subr.bf16.mxu0 0
  %1497 = vmatpush1.bf16.msra.mxu0 0
  %1498 = vmatprep.subr.bf16.mxu0 0
  %1499 = vmatpush1.bf16.msra.mxu0 0
  %1500 = vmatprep.mubr.bf16.mxu0 0
  %1501 = vmatmul.mubr.bf16.gmra.mrb[0].mxu0 %v137
  %v1502 = vpop.f32.mrb[0].mxu0
  %v1503 = vadd.f32 0.0, %v1502
  %v1504 = vpop.f32.mrb[0].mxu0
  %v1505 = vpop.f32.mrb[0].mxu0
  %v1506 = vadd.f32 0.0, %v1505
  %v1507 = vpop.f32.mrb[0].mxu0
  %1508 = vmatprep.mubr.bf16.mxu0 0
  %1509 = vmatmul.mubr.bf16.gmra.mrb[0].mxu0 %v140
  %v1510 = vpop.f32.mrb[0].mxu0
  %v1511 = vadd.f32 0.0, %v1510
  %v1512 = vpop.f32.mrb[0].mxu0
  %v1513 = vpop.f32.mrb[0].mxu0
  %v1514 = vadd.f32 0.0, %v1513
  %v1515 = vpop.f32.mrb[0].mxu0
  %1516 = vdwg.mxu0
  %v1517 = vpack.c.bf16 %v1506, %v1503
  %v1518 = vpack.c.bf16 %v1514, %v1511
  %s1519 = scalar_lea.vmem %s2, 384
  %v1520 = vld [vmem:[%s1519] sm:$0xf]
  %v1521 = vld [vmem:[%s1519 + $0x4] sm:$0xf]
  %v1522 = vld [vmem:[%s1519 + $0x8] sm:$0xf]
  %v1523 = vld [vmem:[%s1519 + $0xc] sm:$0xf]
  %v1524 = vld [vmem:[%s1519 + $0x10] sm:$0xf]
  %v1525 = vld [vmem:[%s1519 + $0x14] sm:$0xf]
  %v1526 = vld [vmem:[%s1519 + $0x18] sm:$0xf]
  %v1527 = vld [vmem:[%s1519 + $0x1c] sm:$0xf]
  %v1528 = vld [vmem:[%s1519 + $0x20] sm:$0xf]
  %v1529 = vld [vmem:[%s1519 + $0x24] sm:$0xf]
  %v1530 = vld [vmem:[%s1519 + $0x28] sm:$0xf]
  %v1531 = vld [vmem:[%s1519 + $0x2c] sm:$0xf]
  %v1532 = vld [vmem:[%s1519 + $0x30] sm:$0xf]
  %v1533 = vld [vmem:[%s1519 + $0x34] sm:$0xf]
  %v1534 = vld [vmem:[%s1519 + $0x38] sm:$0xf]
  %v1535 = vld [vmem:[%s1519 + $0x3c] sm:$0xf]
  %s1536 = scalar_lea.vmem %s2, 448
  %v1537 = vld [vmem:[%s1536] sm:$0xf]
  %v1538 = vld [vmem:[%s1536 + $0x4] sm:$0xf]
  %v1539 = vld [vmem:[%s1536 + $0x8] sm:$0xf]
  %v1540 = vld [vmem:[%s1536 + $0xc] sm:$0xf]
  %v1541 = vld [vmem:[%s1536 + $0x10] sm:$0xf]
  %v1542 = vld [vmem:[%s1536 + $0x14] sm:$0xf]
  %v1543 = vld [vmem:[%s1536 + $0x18] sm:$0xf]
  %v1544 = vld [vmem:[%s1536 + $0x1c] sm:$0xf]
  %v1545 = vld [vmem:[%s1536 + $0x20] sm:$0xf]
  %v1546 = vld [vmem:[%s1536 + $0x24] sm:$0xf]
  %v1547 = vld [vmem:[%s1536 + $0x28] sm:$0xf]
  %v1548 = vld [vmem:[%s1536 + $0x2c] sm:$0xf]
  %v1549 = vld [vmem:[%s1536 + $0x30] sm:$0xf]
  %v1550 = vld [vmem:[%s1536 + $0x34] sm:$0xf]
  %v1551 = vld [vmem:[%s1536 + $0x38] sm:$0xf]
  %v1552 = vld [vmem:[%s1536 + $0x3c] sm:$0xf]
  %v1569 = vunpack.c.l.b16 %v1537
  %v1570 = vunpack.c.l.b16 %v1538
  %v1571 = vunpack.c.l.b16 %v1539
  %v1572 = vunpack.c.l.b16 %v1540
  %v1573 = vunpack.c.l.b16 %v1541
  %v1574 = vunpack.c.l.b16 %v1542
  %v1575 = vunpack.c.l.b16 %v1543
  %v1576 = vunpack.c.l.b16 %v1544
  %v1577 = vunpack.c.l.b16 %v1545
  %v1578 = vunpack.c.l.b16 %v1546
  %v1579 = vunpack.c.l.b16 %v1547
  %v1580 = vunpack.c.l.b16 %v1548
  %v1581 = vunpack.c.l.b16 %v1549
  %v1582 = vunpack.c.l.b16 %v1550
  %v1583 = vunpack.c.l.b16 %v1551
  %v1584 = vunpack.c.l.b16 %v1552
  %v1585 = vpack.c.b16 %v1570, %v1569
  %v1586 = vpack.c.b16 %v1572, %v1571
  %v1587 = vpack.c.b16 %v1574, %v1573
  %v1588 = vpack.c.b16 %v1576, %v1575
  %v1589 = vpack.c.b16 %v1578, %v1577
  %v1590 = vpack.c.b16 %v1580, %v1579
  %v1591 = vpack.c.b16 %v1582, %v1581
  %v1592 = vpack.c.b16 %v1584, %v1583
  %1601 = vmatprep.subr.bf16.mxu0 0
  %1602 = vmatpush1.bf16.msra.mxu0 %v1585
  %1603 = vmatprep.subr.bf16.mxu0 0
  %1604 = vmatpush1.bf16.msra.mxu0 %v1586
  %1605 = vmatprep.subr.bf16.mxu0 0
  %1606 = vmatpush1.bf16.msra.mxu0 %v1587
  %1607 = vmatprep.subr.bf16.mxu0 0
  %1608 = vmatpush1.bf16.msra.mxu0 %v1588
  %1609 = vmatprep.subr.bf16.mxu0 0
  %1610 = vmatpush1.bf16.msra.mxu0 %v1589
  %1611 = vmatprep.subr.bf16.mxu0 0
  %1612 = vmatpush1.bf16.msra.mxu0 %v1590
  %1613 = vmatprep.subr.bf16.mxu0 0
  %1614 = vmatpush1.bf16.msra.mxu0 %v1591
  %1615 = vmatprep.subr.bf16.mxu0 0
  %1616 = vmatpush1.bf16.msra.mxu0 %v1592
  %1617 = vmatprep.subr.bf16.mxu0 0
  %1618 = vmatpush1.bf16.msra.mxu0 0
  %1619 = vmatprep.subr.bf16.mxu0 0
  %1620 = vmatpush1.bf16.msra.mxu0 0
  %1621 = vmatprep.subr.bf16.mxu0 0
  %1622 = vmatpush1.bf16.msra.mxu0 0
  %1623 = vmatprep.subr.bf16.mxu0 0
  %1624 = vmatpush1.bf16.msra.mxu0 0
  %1625 = vmatprep.subr.bf16.mxu0 0
  %1626 = vmatpush1.bf16.msra.mxu0 0
  %1627 = vmatprep.subr.bf16.mxu0 0
  %1628 = vmatpush1.bf16.msra.mxu0 0
  %1629 = vmatprep.subr.bf16.mxu0 0
  %1630 = vmatpush1.bf16.msra.mxu0 0
  %1631 = vmatprep.subr.bf16.mxu0 0
  %1632 = vmatpush1.bf16.msra.mxu0 0
  %1633 = vmatprep.mubr.bf16.mxu0 0
  %1634 = vmatmul.mubr.bf16.gmra.mrb[0].mxu0 %v1415
  %v1635 = vpop.f32.mrb[0].mxu0
  %v1636 = vadd.f32 0.0, %v1635
  %v1637 = vpop.f32.mrb[0].mxu0
  %v1638 = vpop.f32.mrb[0].mxu0
  %v1639 = vadd.f32 0.0, %v1638
  %v1640 = vpop.f32.mrb[0].mxu0
  %1641 = vmatprep.mubr.bf16.mxu0 0
  %1642 = vmatmul.mubr.bf16.gmra.mrb[0].mxu0 %v1416
  %v1643 = vpop.f32.mrb[0].mxu0
  %v1644 = vadd.f32 0.0, %v1643
  %v1645 = vpop.f32.mrb[0].mxu0
  %v1646 = vpop.f32.mrb[0].mxu0
  %v1647 = vadd.f32 0.0, %v1646
  %v1648 = vpop.f32.mrb[0].mxu0
  %1649 = vdwg.mxu0
  %v1666 = vunpack.c.l.b16 %v1520
  %v1667 = vunpack.c.l.b16 %v1521
  %v1668 = vunpack.c.l.b16 %v1522
  %v1669 = vunpack.c.l.b16 %v1523
  %v1670 = vunpack.c.l.b16 %v1524
  %v1671 = vunpack.c.l.b16 %v1525
  %v1672 = vunpack.c.l.b16 %v1526
  %v1673 = vunpack.c.l.b16 %v1527
  %v1674 = vunpack.c.l.b16 %v1528
  %v1675 = vunpack.c.l.b16 %v1529
  %v1676 = vunpack.c.l.b16 %v1530
  %v1677 = vunpack.c.l.b16 %v1531
  %v1678 = vunpack.c.l.b16 %v1532
  %v1679 = vunpack.c.l.b16 %v1533
  %v1680 = vunpack.c.l.b16 %v1534
  %v1681 = vunpack.c.l.b16 %v1535
  %v1682 = vpack.c.b16 %v1667, %v1666
  %v1683 = vpack.c.b16 %v1669, %v1668
  %v1684 = vpack.c.b16 %v1671, %v1670
  %v1685 = vpack.c.b16 %v1673, %v1672
  %v1686 = vpack.c.b16 %v1675, %v1674
  %v1687 = vpack.c.b16 %v1677, %v1676
  %v1688 = vpack.c.b16 %v1679, %v1678
  %v1689 = vpack.c.b16 %v1681, %v1680
  %1698 = vmatprep.subr.bf16.mxu0 0
  %1699 = vmatpush1.bf16.msra.mxu0 %v1682
  %1700 = vmatprep.subr.bf16.mxu0 0
  %1701 = vmatpush1.bf16.msra.mxu0 %v1683
  %1702 = vmatprep.subr.bf16.mxu0 0
  %1703 = vmatpush1.bf16.msra.mxu0 %v1684
  %1704 = vmatprep.subr.bf16.mxu0 0
  %1705 = vmatpush1.bf16.msra.mxu0 %v1685
  %1706 = vmatprep.subr.bf16.mxu0 0
  %1707 = vmatpush1.bf16.msra.mxu0 %v1686
  %1708 = vmatprep.subr.bf16.mxu0 0
  %1709 = vmatpush1.bf16.msra.mxu0 %v1687
  %1710 = vmatprep.subr.bf16.mxu0 0
  %1711 = vmatpush1.bf16.msra.mxu0 %v1688
  %1712 = vmatprep.subr.bf16.mxu0 0
  %1713 = vmatpush1.bf16.msra.mxu0 %v1689
  %1714 = vmatprep.subr.bf16.mxu0 0
  %1715 = vmatpush1.bf16.msra.mxu0 0
  %1716 = vmatprep.subr.bf16.mxu0 0
  %1717 = vmatpush1.bf16.msra.mxu0 0
  %1718 = vmatprep.subr.bf16.mxu0 0
  %1719 = vmatpush1.bf16.msra.mxu0 0
  %1720 = vmatprep.subr.bf16.mxu0 0
  %1721 = vmatpush1.bf16.msra.mxu0 0
  %1722 = vmatprep.subr.bf16.mxu0 0
  %1723 = vmatpush1.bf16.msra.mxu0 0
  %1724 = vmatprep.subr.bf16.mxu0 0
  %1725 = vmatpush1.bf16.msra.mxu0 0
  %1726 = vmatprep.subr.bf16.mxu0 0
  %1727 = vmatpush1.bf16.msra.mxu0 0
  %1728 = vmatprep.subr.bf16.mxu0 0
  %1729 = vmatpush1.bf16.msra.mxu0 0
  %1730 = vmatprep.mubr.bf16.mxu0 0
  %1731 = vmatmul.mubr.bf16.gmra.mrb[0].mxu0 %v1466
  %v1732 = vpop.f32.mrb[0].mxu0
  %v1733 = vadd.f32 %v1636, %v1732
  %v1734 = vpop.f32.mrb[0].mxu0
  %v1735 = vpop.f32.mrb[0].mxu0
  %v1736 = vadd.f32 %v1639, %v1735
  %v1737 = vpop.f32.mrb[0].mxu0
  %1738 = vmatprep.mubr.bf16.mxu0 0
  %1739 = vmatmul.mubr.bf16.gmra.mrb[0].mxu0 %v1467
  %v1740 = vpop.f32.mrb[0].mxu0
  %v1741 = vadd.f32 %v1644, %v1740
  %v1742 = vpop.f32.mrb[0].mxu0
  %v1743 = vpop.f32.mrb[0].mxu0
  %v1744 = vadd.f32 %v1647, %v1743
  %v1745 = vpop.f32.mrb[0].mxu0
  %1746 = vdwg.mxu0
  %s1747 = scalar_lea.vmem %s2, 512
  %v1748 = vld [vmem:[%s1747] sm:$0xf]
  %v1749 = vld [vmem:[%s1747 + $0x4] sm:$0xf]
  %v1750 = vld [vmem:[%s1747 + $0x8] sm:$0xf]
  %v1751 = vld [vmem:[%s1747 + $0xc] sm:$0xf]
  %v1752 = vld [vmem:[%s1747 + $0x10] sm:$0xf]
  %v1753 = vld [vmem:[%s1747 + $0x14] sm:$0xf]
  %v1754 = vld [vmem:[%s1747 + $0x18] sm:$0xf]
  %v1755 = vld [vmem:[%s1747 + $0x1c] sm:$0xf]
  %v1756 = vld [vmem:[%s1747 + $0x20] sm:$0xf]
  %v1757 = vld [vmem:[%s1747 + $0x24] sm:$0xf]
  %v1758 = vld [vmem:[%s1747 + $0x28] sm:$0xf]
  %v1759 = vld [vmem:[%s1747 + $0x2c] sm:$0xf]
  %v1760 = vld [vmem:[%s1747 + $0x30] sm:$0xf]
  %v1761 = vld [vmem:[%s1747 + $0x34] sm:$0xf]
  %v1762 = vld [vmem:[%s1747 + $0x38] sm:$0xf]
  %v1763 = vld [vmem:[%s1747 + $0x3c] sm:$0xf]
  %v1780 = vunpack.c.l.b16 %v1748
  %v1781 = vunpack.c.l.b16 %v1749
  %v1782 = vunpack.c.l.b16 %v1750
  %v1783 = vunpack.c.l.b16 %v1751
  %v1784 = vunpack.c.l.b16 %v1752
  %v1785 = vunpack.c.l.b16 %v1753
  %v1786 = vunpack.c.l.b16 %v1754
  %v1787 = vunpack.c.l.b16 %v1755
  %v1788 = vunpack.c.l.b16 %v1756
  %v1789 = vunpack.c.l.b16 %v1757
  %v1790 = vunpack.c.l.b16 %v1758
  %v1791 = vunpack.c.l.b16 %v1759
  %v1792 = vunpack.c.l.b16 %v1760
  %v1793 = vunpack.c.l.b16 %v1761
  %v1794 = vunpack.c.l.b16 %v1762
  %v1795 = vunpack.c.l.b16 %v1763
  %v1796 = vpack.c.b16 %v1781, %v1780
  %v1797 = vpack.c.b16 %v1783, %v1782
  %v1798 = vpack.c.b16 %v1785, %v1784
  %v1799 = vpack.c.b16 %v1787, %v1786
  %v1800 = vpack.c.b16 %v1789, %v1788
  %v1801 = vpack.c.b16 %v1791, %v1790
  %v1802 = vpack.c.b16 %v1793, %v1792
  %v1803 = vpack.c.b16 %v1795, %v1794
  %1812 = vmatprep.subr.bf16.mxu0 0
  %1813 = vmatpush1.bf16.msra.mxu0 %v1796
  %1814 = vmatprep.subr.bf16.mxu0 0
  %1815 = vmatpush1.bf16.msra.mxu0 %v1797
  %1816 = vmatprep.subr.bf16.mxu0 0
  %1817 = vmatpush1.bf16.msra.mxu0 %v1798
  %1818 = vmatprep.subr.bf16.mxu0 0
  %1819 = vmatpush1.bf16.msra.mxu0 %v1799
  %1820 = vmatprep.subr.bf16.mxu0 0
  %1821 = vmatpush1.bf16.msra.mxu0 %v1800
  %1822 = vmatprep.subr.bf16.mxu0 0
  %1823 = vmatpush1.bf16.msra.mxu0 %v1801
  %1824 = vmatprep.subr.bf16.mxu0 0
  %1825 = vmatpush1.bf16.msra.mxu0 %v1802
  %1826 = vmatprep.subr.bf16.mxu0 0
  %1827 = vmatpush1.bf16.msra.mxu0 %v1803
  %1828 = vmatprep.subr.bf16.mxu0 0
  %1829 = vmatpush1.bf16.msra.mxu0 0
  %1830 = vmatprep.subr.bf16.mxu0 0
  %1831 = vmatpush1.bf16.msra.mxu0 0
  %1832 = vmatprep.subr.bf16.mxu0 0
  %1833 = vmatpush1.bf16.msra.mxu0 0
  %1834 = vmatprep.subr.bf16.mxu0 0
  %1835 = vmatpush1.bf16.msra.mxu0 0
  %1836 = vmatprep.subr.bf16.mxu0 0
  %1837 = vmatpush1.bf16.msra.mxu0 0
  %1838 = vmatprep.subr.bf16.mxu0 0
  %1839 = vmatpush1.bf16.msra.mxu0 0
  %1840 = vmatprep.subr.bf16.mxu0 0
  %1841 = vmatpush1.bf16.msra.mxu0 0
  %1842 = vmatprep.subr.bf16.mxu0 0
  %1843 = vmatpush1.bf16.msra.mxu0 0
  %1844 = vmatprep.mubr.bf16.mxu0 0
  %1845 = vmatmul.mubr.bf16.gmra.mrb[0].mxu0 %v1517
  %v1846 = vpop.f32.mrb[0].mxu0
  %v1847 = vadd.f32 0.0, %v1846
  %v1848 = vpop.f32.mrb[0].mxu0
  %v1849 = vpop.f32.mrb[0].mxu0
  %v1850 = vadd.f32 0.0, %v1849
  %v1851 = vpop.f32.mrb[0].mxu0
  %1852 = vmatprep.mubr.bf16.mxu0 0
  %1853 = vmatmul.mubr.bf16.gmra.mrb[0].mxu0 %v1518
  %v1854 = vpop.f32.mrb[0].mxu0
  %v1855 = vadd.f32 0.0, %v1854
  %v1856 = vpop.f32.mrb[0].mxu0
  %v1857 = vpop.f32.mrb[0].mxu0
  %v1858 = vadd.f32 0.0, %v1857
  %v1859 = vpop.f32.mrb[0].mxu0
  %1860 = vdwg.mxu0
  %v1861 = vadd.f32 %v1733, %v1847
  %v1862 = vadd.f32 %v1736, %v1850
  %v1863 = vadd.f32 %v1741, %v1855
  %v1864 = vadd.f32 %v1744, %v1858
  %s1865 = scalar_lea.vmem %s3, 2
  %v1866 = vld [vmem:[%s1865] sm:$0x1]
  %v1868 = vlaneseq
  %v1869 = vshrl.u32 %v1868, 7
  %v1870 = vsub.s32 0, %v1869
  %v1871 = vrot.slane %v1866, %v1870
  %v1873 = vadd.f32 %v1861, %v1871
  %v1874 = vadd.f32 %v1862, %v1871
  %v1875 = vadd.f32 %v1863, %v1871
  %v1876 = vadd.f32 %v1864, %v1871
  %v1877 = vadd.f32 %v1873, %v1874
  %v1878 = vadd.f32 %v1877, %v1875
  %v1879 = vadd.f32 %v1878, %v1876
  %v1880 = vrot.slane %v1879, 4
  %v1881 = vadd.f32 %v1879, %v1880
  %v1882 = vrot.slane %v1881, 2
  %v1883 = vadd.f32 %v1881, %v1882
  %v1884 = vrot.slane %v1883, 1
  %v1885 = vadd.f32 %v1883, %v1884
  %1886 = vmatprep.subr.mxu0 0.0
  %1887 = vmatpush1.msra.mxu0 %v40
  %1888 = vmatprep.subr.mxu0 0.0
  %1889 = vmatpush1.msra.mxu0 %v41
  %1890 = vmatprep.subr.mxu0 0.0
  %1891 = vmatpush1.msra.mxu0 %v42
  %1892 = vmatprep.subr.mxu0 0.0
  %1893 = vmatpush1.msra.mxu0 %v43
  %1894 = vmatprep.subr.mxu0 0.0
  %1895 = vmatpush1.msra.mxu0 %v44
  %1896 = vmatprep.subr.mxu0 0.0
  %1897 = vmatpush1.msra.mxu0 %v45
  %1898 = vmatprep.subr.mxu0 0.0
  %1899 = vmatpush1.msra.mxu0 %v46
  %1900 = vmatprep.subr.mxu0 0.0
  %1901 = vmatpush1.msra.mxu0 %v47
  %1902 = vmatprep.subr.mxu0 0.0
  %1903 = vmatpush1.msra.mxu0 %v48
  %1904 = vmatprep.subr.mxu0 0.0
  %1905 = vmatpush1.msra.mxu0 %v49
  %1906 = vmatprep.subr.mxu0 0.0
  %1907 = vmatpush1.msra.mxu0 %v50
  %1908 = vmatprep.subr.mxu0 0.0
  %1909 = vmatpush1.msra.mxu0 %v51
  %1910 = vmatprep.subr.mxu0 0.0
  %1911 = vmatpush1.msra.mxu0 %v52
  %1912 = vmatprep.subr.mxu0 0.0
  %1913 = vmatpush1.msra.mxu0 %v53
  %1914 = vmatprep.subr.mxu0 0.0
  %1915 = vmatpush1.msra.mxu0 %v54
  %1916 = vmatprep.subr.mxu0 0.0
  %1917 = vmatpush1.msra.mxu0 %v55
  %1918 = vmatprep.subr.mxu0 0.0
  %1919 = vmatpush1.msra.mxu0 0.0
  %1920 = vmatprep.subr.mxu0 0.0
  %1921 = vmatpush1.msra.mxu0 0.0
  %1922 = vmatprep.subr.mxu0 0.0
  %1923 = vmatpush1.msra.mxu0 0.0
  %1924 = vmatprep.subr.mxu0 0.0
  %1925 = vmatpush1.msra.mxu0 0.0
  %1926 = vmatprep.subr.mxu0 0.0
  %1927 = vmatpush1.msra.mxu0 0.0
  %1928 = vmatprep.subr.mxu0 0.0
  %1929 = vmatpush1.msra.mxu0 0.0
  %1930 = vmatprep.subr.mxu0 0.0
  %1931 = vmatpush1.msra.mxu0 0.0
  %1932 = vmatprep.subr.mxu0 0.0
  %1933 = vmatpush1.msra.mxu0 0.0
  %1934 = vmatprep.subr.mxu0 0.0
  %1935 = vmatpush1.msra.mxu0 0.0
  %1936 = vmatprep.subr.mxu0 0.0
  %1937 = vmatpush1.msra.mxu0 0.0
  %1938 = vmatprep.subr.mxu0 0.0
  %1939 = vmatpush1.msra.mxu0 0.0
  %1940 = vmatprep.subr.mxu0 0.0
  %1941 = vmatpush1.msra.mxu0 0.0
  %1942 = vmatprep.subr.mxu0 0.0
  %1943 = vmatpush1.msra.mxu0 0.0
  %1944 = vmatprep.subr.mxu0 0.0
  %1945 = vmatpush1.msra.mxu0 0.0
  %1946 = vmatprep.subr.mxu0 0.0
  %1947 = vmatpush1.msra.mxu0 0.0
  %1948 = vmatprep.subr.mxu0 0.0
  %1949 = vmatpush1.msra.mxu0 0.0
  %1950 = vmatprep.mubr.f32.mxu0 0.0
  %1951 = vmatmul.mubr.f32.gmra.mrb[0].mxu0 %v1885
  %v1952 = vpop.f32.mrb[0].mxu0
  %v1953 = vadd.f32 0.0, %v1952
  %v1954 = vpop.f32.mrb[0].mxu0
  %1955 = vdwg.mxu0
  %v1956 = vmul.f32 %v1953, 0.001953125
  %v1957 = vlaneseq
  %v1958 = vshrl.u32 %v1957, 7
  %v1959 = vsub.s32 0, %v1958
  %v1960 = vrot.slane %v1956, %v1959
  %v1961 = vsub.f32 %v1873, %v1960
  %v1962 = vsub.f32 %v1874, %v1960
  %v1963 = vsub.f32 %v1875, %v1960
  %v1964 = vsub.f32 %v1876, %v1960
  %v1965 = vmul.f32 %v1961, %v1961
  %v1966 = vmul.f32 %v1962, %v1962
  %v1967 = vmul.f32 %v1963, %v1963
  %v1968 = vmul.f32 %v1964, %v1964
  %v1969 = vadd.f32 %v1965, %v1966
  %v1970 = vadd.f32 %v1969, %v1967
  %v1971 = vadd.f32 %v1970, %v1968
  %v1972 = vrot.slane %v1971, 4
  %v1973 = vadd.f32 %v1971, %v1972
  %v1974 = vrot.slane %v1973, 2
  %v1975 = vadd.f32 %v1973, %v1974
  %v1976 = vrot.slane %v1975, 1
  %v1977 = vadd.f32 %v1975, %v1976
  %1978 = vmatprep.subr.mxu0 0.0
  %1979 = vmatpush1.msra.mxu0 %v40
  %1980 = vmatprep.subr.mxu0 0.0
  %1981 = vmatpush1.msra.mxu0 %v41
  %1982 = vmatprep.subr.mxu0 0.0
  %1983 = vmatpush1.msra.mxu0 %v42
  %1984 = vmatprep.subr.mxu0 0.0
  %1985 = vmatpush1.msra.mxu0 %v43
  %1986 = vmatprep.subr.mxu0 0.0
  %1987 = vmatpush1.msra.mxu0 %v44
  %1988 = vmatprep.subr.mxu0 0.0
  %1989 = vmatpush1.msra.mxu0 %v45
  %1990 = vmatprep.subr.mxu0 0.0
  %1991 = vmatpush1.msra.mxu0 %v46
  %1992 = vmatprep.subr.mxu0 0.0
  %1993 = vmatpush1.msra.mxu0 %v47
  %1994 = vmatprep.subr.mxu0 0.0
  %1995 = vmatpush1.msra.mxu0 %v48
  %1996 = vmatprep.subr.mxu0 0.0
  %1997 = vmatpush1.msra.mxu0 %v49
  %1998 = vmatprep.subr.mxu0 0.0
  %1999 = vmatpush1.msra.mxu0 %v50
  %2000 = vmatprep.subr.mxu0 0.0
  %2001 = vmatpush1.msra.mxu0 %v51
  %2002 = vmatprep.subr.mxu0 0.0
  %2003 = vmatpush1.msra.mxu0 %v52
  %2004 = vmatprep.subr.mxu0 0.0
  %2005 = vmatpush1.msra.mxu0 %v53
  %2006 = vmatprep.subr.mxu0 0.0
  %2007 = vmatpush1.msra.mxu0 %v54
  %2008 = vmatprep.subr.mxu0 0.0
  %2009 = vmatpush1.msra.mxu0 %v55
  %2010 = vmatprep.subr.mxu0 0.0
  %2011 = vmatpush1.msra.mxu0 0.0
  %2012 = vmatprep.subr.mxu0 0.0
  %2013 = vmatpush1.msra.mxu0 0.0
  %2014 = vmatprep.subr.mxu0 0.0
  %2015 = vmatpush1.msra.mxu0 0.0
  %2016 = vmatprep.subr.mxu0 0.0
  %2017 = vmatpush1.msra.mxu0 0.0
  %2018 = vmatprep.subr.mxu0 0.0
  %2019 = vmatpush1.msra.mxu0 0.0
  %2020 = vmatprep.subr.mxu0 0.0
  %2021 = vmatpush1.msra.mxu0 0.0
  %2022 = vmatprep.subr.mxu0 0.0
  %2023 = vmatpush1.msra.mxu0 0.0
  %2024 = vmatprep.subr.mxu0 0.0
  %2025 = vmatpush1.msra.mxu0 0.0
  %2026 = vmatprep.subr.mxu0 0.0
  %2027 = vmatpush1.msra.mxu0 0.0
  %2028 = vmatprep.subr.mxu0 0.0
  %2029 = vmatpush1.msra.mxu0 0.0
  %2030 = vmatprep.subr.mxu0 0.0
  %2031 = vmatpush1.msra.mxu0 0.0
  %2032 = vmatprep.subr.mxu0 0.0
  %2033 = vmatpush1.msra.mxu0 0.0
  %2034 = vmatprep.subr.mxu0 0.0
  %2035 = vmatpush1.msra.mxu0 0.0
  %2036 = vmatprep.subr.mxu0 0.0
  %2037 = vmatpush1.msra.mxu0 0.0
  %2038 = vmatprep.subr.mxu0 0.0
  %2039 = vmatpush1.msra.mxu0 0.0
  %2040 = vmatprep.subr.mxu0 0.0
  %2041 = vmatpush1.msra.mxu0 0.0
  %2042 = vmatprep.mubr.f32.mxu0 0.0
  %2043 = vmatmul.mubr.f32.gmra.mrb[0].mxu0 %v1977
  %v2044 = vpop.f32.mrb[0].mxu0
  %v2045 = vadd.f32 0.0, %v2044
  %v2046 = vpop.f32.mrb[0].mxu0
  %2047 = vdwg.mxu0
  %v2048 = vmul.f32 %v2045, 0.001953125
  %s2049 = scalar_lea.vmem %s4, 2
  %v2050 = vld [vmem:[%s2049] sm:$0x1]
  %v2051 = vadd.f32 %v2048, 1e-05
  %v2052 = vrsqrt.pop %v2051
  %v2053 = vmul.f32 %v2050, %v2052
  %v2055 = vlaneseq
  %v2056 = vshrl.u32 %v2055, 7
  %v2057 = vsub.s32 0, %v2056
  %v2058 = vrot.slane %v2053, %v2057
  %v2060 = vmul.f32 %v1961, %v2058
  %v2061 = vmul.f32 %v1962, %v2058
  %v2062 = vmul.f32 %v1963, %v2058
  %v2063 = vmul.f32 %v1964, %v2058
  %s2064 = scalar_lea.vmem %s5, 2
  %v2065 = vld [vmem:[%s2064] sm:$0x1]
  %v2067 = vlaneseq
  %v2068 = vshrl.u32 %v2067, 7
  %v2069 = vsub.s32 0, %v2068
  %v2070 = vrot.slane %v2065, %v2069
  %v2072 = vadd.f32 %v2060, %v2070
  %v2073 = vadd.f32 %v2061, %v2070
  %v2074 = vadd.f32 %v2062, %v2070
  %v2075 = vadd.f32 %v2063, %v2070
  %v2076 = vmax.f32 %v2072, 0.0
  %v2077 = vmax.f32 %v2073, 0.0
  %v2078 = vmax.f32 %v2074, 0.0
  %v2079 = vmax.f32 %v2075, 0.0
  %2080 = vst [vmem:[%s7] sm:$0xff] %v2076
  %2081 = vst [vmem:[%s7 + $0x8] sm:$0xff] %v2077
  %2082 = vst [vmem:[%s7 + $0x10] sm:$0xff] %v2078
  %2083 = vst [vmem:[%s7 + $0x18] sm:$0xff] %v2079
  // Predicated region
  $region30: #{conv_forward.1} parent=0 // pred_check
    _
  $region31: #{conv_forward.1} parent=0 // pred_check_branch
    %2085 = sbr.rel (0) target = $region33
  $region32: #{conv_forward.1} parent=0 // pred_region
    _
  $region33: #{conv_forward.1} parent=0 // pred_fallthru
    _
  // Predicated region
  $region34: #{conv_forward.1} parent=0 // pred_check
    _
  $region35: #{conv_forward.1} parent=0 // pred_check_branch
    %2087 = sbr.rel (0) target = $region37
  $region36: #{conv_forward.1} parent=0 // pred_region
    _
  $region37: #{conv_forward.1} parent=0 // pred_fallthru
    _

</llo_original>
